<compile_context>
chip_gen: v5e
topology: v5e:2x2
jax: 0.10.0
libtpu: 0.0.40
codegen_flags: <defaults>
</compile_context>

<pallas_src>
import jax
import jax.numpy as jnp
from jax import lax
from jax.experimental import pallas as pl
from jax.experimental.pallas import tpu as pltpu

BN_EPS = 1e-5


def _fold_bn(gamma, beta, mean, var):
    """Eval-mode BN as per-channel scale/bias (scale folded into conv weight)."""
    scale = gamma / jnp.sqrt(var + BN_EPS)
    bias = beta - mean * scale
    return scale.astype(jnp.float32), bias.astype(jnp.float32)


# ---------------------------------------------------------------------------
# Fused Bottleneck kernel (one grid step == one (batch, H-tile))
# ---------------------------------------------------------------------------
def _bottleneck_kernel(x_ref, halo_ref, w1_ref, b1_ref, w2_ref, b2_ref,
                       w3_ref, b3_ref, o_ref):
    """Refs:
      x_ref    : (1, th, W, cin)     input rows of this H-tile (NHWC)
      halo_ref : (1, 1, 2, W, cin)   x row above / below the tile (zeros at edges)
      w1_ref   : (cin, planes)       conv1 weight * bn1 scale
      b1_ref   : (1, planes)         bn1 bias (f32)
      w2_ref   : (9*planes, planes)  conv2 3x3 weight * bn2 scale, (kh,kw,cin)-major
      b2_ref   : (1, planes)
      w3_ref   : (planes, cout)      conv3 weight * bn3 scale
      b3_ref   : (1, cout)
      o_ref    : (1, th*W, cout)     output rows (H*W flattened)
    """
    ht = pl.program_id(1)
    n_ht = pl.num_programs(1)

    _, th, w, cin = x_ref.shape
    planes = w1_ref.shape[1]
    cdt = w2_ref.dtype                     # compute dtype (f32 or bf16)

    # --- stage 1: conv1 (1x1) + bn1 + relu, halo rows in the same matmul ----
    x_val = x_ref[0]                                        # (th, w, cin)
    hv = halo_ref[0, 0]                                     # (2, w, cin)
    lhs = jnp.concatenate([hv[0:1], x_val, hv[1:2]], axis=0)  # (th+2, w, cin)
    y1 = jnp.dot(lhs.reshape((th + 2) * w, cin), w1_ref[...],
                 preferred_element_type=jnp.float32)
    y1 = jnp.maximum(y1 + b1_ref[...], 0.0).reshape(th + 2, w, planes)
    # Halo rows at the image border must be exactly zero (relu(bias) != 0).
    row = lax.broadcasted_iota(jnp.int32, (th + 2, w, planes), 0)
    drop = ((row == 0) & (ht == 0)) | ((row == th + 1) & (ht == n_ht - 1))
    y1 = jnp.where(drop, 0.0, y1).astype(cdt)

    # --- stage 2: conv2 (3x3, pad=1) + bn2 + relu via one im2col matmul -----
    zcol = jnp.zeros((th + 2, 1, planes), cdt)
    y1p = jnp.concatenate([zcol, y1, zcol], axis=1)         # (th+2, w+2, planes)
    taps = [y1p[kh:kh + th, kw:kw + w, :].reshape(th * w, planes)
            for kh in range(3) for kw in range(3)]
    slab = jnp.concatenate(taps, axis=-1)                   # (th*w, 9*planes)
    z2 = jnp.dot(slab, w2_ref[...], preferred_element_type=jnp.float32)
    z2 = jnp.maximum(z2 + b2_ref[...], 0.0)

    # --- stage 3: conv3 (1x1) + bn3 + residual add + relu -------------------
    y3 = jnp.dot(z2.astype(cdt), w3_ref[...],
                 preferred_element_type=jnp.float32)
    res = x_val.reshape(th * w, cin).astype(jnp.float32)    # aligned residual
    o_ref[0] = jnp.maximum(y3 + b3_ref[...] + res, 0.0).astype(o_ref.dtype)


# ---------------------------------------------------------------------------
# Tile selection + wrapper
# ---------------------------------------------------------------------------
def _pick_tile_h(h, w, n, cin, cout, itemsize, budget=6 << 20):
    """Largest divisor of h whose per-step (double-buffered) block footprint
    fits the budget while leaving >= 4 grid steps (keeps both v7x TCs busy)."""
    cands = [th for th in range(1, h + 1)
             if h % th == 0 and (h // th == 1 or (th * w) % 8 == 0)]

    def foot(th):
        return (2 * th * w * cin * itemsize + 4 * w * cin * itemsize
                + 2 * th * w * cout * 4)

    fitting = [th for th in cands if foot(th) <= budget]
    if not fitting:
        return min(cands)
    busy = [th for th in fitting if n * (h // th) >= 4]
    return max(busy) if busy else max(fitting)


def bottleneck_forward_nhwc(x_nhwc, params, *, tile_h=None,
                            compute_dtype=jnp.float32,
                            out_dtype=jnp.float32):
    """Fused HRNet Bottleneck forward (stride=1, downsample=None), NHWC in/out."""
    n, h, w, cin = x_nhwc.shape
    planes = params["w1"].shape[1]
    cout = params["w3"].shape[1]
    # downsample=None requires residual and conv3 output channels to match.
    assert cout == cin, "Bottleneck(downsample=None) needs inplanes == 4*planes"

    bpe = jnp.dtype(compute_dtype).itemsize
    if tile_h is None:
        tile_h = _pick_tile_h(h, w, n, cin, cout, bpe)
    th = tile_h
    assert h % th == 0, "tile_h must divide H"
    n_ht = h // th
    assert n_ht == 1 or (th * w) % 8 == 0, "tile_h * W must be a multiple of 8"

    # Fold eval-mode BN scales into conv weights; biases stay f32 epilogue adds.
    s1, b1 = _fold_bn(*params["bn1"])
    s2, b2 = _fold_bn(*params["bn2"])
    s3, b3 = _fold_bn(*params["bn3"])
    w1f = (params["w1"] * s1[None, :]).astype(compute_dtype)
    w2f = (params["w2"] * s2[None, None, None, :]).reshape(9 * planes, planes)
    w2f = w2f.astype(compute_dtype)
    w3f = (params["w3"] * s3[None, :]).astype(compute_dtype)

    x = x_nhwc.astype(compute_dtype)

    # Halo rows: the x row directly above / below each H-tile (zeros at the
    # image border).  Only 2 rows per tile — the full x is never copied/padded.
    zrow = jnp.zeros((n, 1, w, cin), compute_dtype)
    top = jnp.concatenate([zrow, x[:, th - 1:h - 1:th]], axis=1)
    bot = jnp.concatenate([x[:, th::th], zrow], axis=1)
    halo = jnp.stack([top, bot], axis=2)                  # (n, n_ht, 2, w, cin)

    # Explicit VMEM budget: double-buffered x/halo/out blocks + weights + the
    # in-kernel im2col / conv1 temporaries, with 2x headroom (min 16 MiB so it
    # never goes below the v5e scoped default, max 64 MiB for v7x physical).
    act = 2 * (th * w * cin * bpe) + 2 * (2 * w * cin * bpe) \
        + 2 * (th * w * cout * jnp.dtype(out_dtype).itemsize)
    wgt = 2 * (cin * planes + 9 * planes * planes + planes * cout) * bpe \
        + 2 * (2 * planes + cout) * 4
    tmp = ((th + 2) * (w + 2) * planes + 10 * th * w * planes
           + th * w * (planes + cout) + (th + 2) * w * cin) * 4
    vmem_limit = int(min(max(2 * (act + wgt + tmp), 16 << 20), 64 << 20))

    out_rows = pl.pallas_call(
        _bottleneck_kernel,
        out_shape=jax.ShapeDtypeStruct((n, h * w, cout), out_dtype),
        grid_spec=pltpu.PrefetchScalarGridSpec(
            num_scalar_prefetch=0,
            grid=(n, n_ht),
            in_specs=[
                pl.BlockSpec((1, th, w, cin), lambda b, t: (b, t, 0, 0)),
                pl.BlockSpec((1, 1, 2, w, cin), lambda b, t: (b, t, 0, 0, 0)),
                pl.BlockSpec((cin, planes), lambda b, t: (0, 0)),
                pl.BlockSpec((1, planes), lambda b, t: (0, 0)),
                pl.BlockSpec((9 * planes, planes), lambda b, t: (0, 0)),
                pl.BlockSpec((1, planes), lambda b, t: (0, 0)),
                pl.BlockSpec((planes, cout), lambda b, t: (0, 0)),
                pl.BlockSpec((1, cout), lambda b, t: (0, 0)),
            ],
            # NOTE: with real HRNet channels (cout = 4*64 = 256) the output
            # block is lane-dense (>=128); the toy test's cout=16 stays
            # correct but uses masked stores.
            out_specs=pl.BlockSpec((1, th * w, cout), lambda b, t: (b, t, 0)),
        ),
        compiler_params=pltpu.CompilerParams(
            dimension_semantics=("parallel", "parallel"),
            vmem_limit_bytes=vmem_limit),
    )(x, halo, w1f, b1.reshape(1, planes), w2f, b2.reshape(1, planes),
      w3f, b3.reshape(1, cout))

    return out_rows.reshape(n, h, w, cout)


def bottleneck_forward(x_nchw, params, **kw):
    """Drop-in NCHW interface matching the PyTorch module layout."""
    # TODO(synk): in a full HRNet port keep activations NHWC end-to-end instead
    # of transposing at every block boundary.
    x_nhwc = jnp.transpose(x_nchw, (0, 2, 3, 1))
    out = bottleneck_forward_nhwc(x_nhwc, params, **kw)
    return jnp.transpose(out, (0, 3, 1, 2))


# ---------------------------------------------------------------------------
# Pure-JAX reference (NHWC, for correctness check)
# ---------------------------------------------------------------------------
def ref_bottleneck_nhwc(x, p):
    def bn(t, g, b, m, v):
        return (t - m) / jnp.sqrt(v + BN_EPS) * g + b

    def conv(t, w_hwio, pad):
        return lax.conv_general_dilated(
            t, w_hwio, window_strides=(1, 1),
            padding=[(pad, pad), (pad, pad)],
            dimension_numbers=("NHWC", "HWIO", "NHWC"))

    w1 = p["w1"][None, None]              # (1,1,Cin,planes)
    w3 = p["w3"][None, None]              # (1,1,planes,4*planes)
    out = jnp.maximum(bn(conv(x, w1, 0), *p["bn1"]), 0.0)
    out = jnp.maximum(bn(conv(out, p["w2"], 1), *p["bn2"]), 0.0)
    out = bn(conv(out, w3, 0), *p["bn3"])
    return jnp.maximum(out + x, 0.0)


# ---------------------------------------------------------------------------
def make_params(key, inplanes, planes):
    expansion = 4
    ks = jax.random.split(key, 6)

    def bn_params(k, c):
        k1, k2, k3, k4 = jax.random.split(k, 4)
        gamma = 1.0 + 0.1 * jax.random.normal(k1, (c,), jnp.float32)
        beta = 0.1 * jax.random.normal(k2, (c,), jnp.float32)
        mean = 0.1 * jax.random.normal(k3, (c,), jnp.float32)
        var = jax.random.uniform(k4, (c,), jnp.float32, 0.5, 1.5)
        return (gamma, beta, mean, var)

    return {
        "w1": 0.1 * jax.random.normal(ks[0], (inplanes, planes), jnp.float32),
        "w2": 0.1 * jax.random.normal(ks[1], (3, 3, planes, planes), jnp.float32),
        "w3": 0.1 * jax.random.normal(ks[2], (planes, planes * expansion),
                                      jnp.float32),
        "bn1": bn_params(ks[3], planes),
        "bn2": bn_params(ks[4], planes),
        "bn3": bn_params(ks[5], planes * expansion),
    }


if __name__ == "__main__":
    # Bottleneck with downsample=None requires inplanes == planes * expansion.
    batch, inplanes, planes, hw = 2, 16, 4, 16
    key = jax.random.PRNGKey(0)
    kx, kp = jax.random.split(key)
    x = jax.random.normal(kx, (batch, hw, hw, inplanes), jnp.float32)  # NHWC
    params = make_params(kp, inplanes, planes)

    out = jax.block_until_ready(jax.jit(bottleneck_forward_nhwc)(x, params))
    ref = jax.block_until_ready(jax.jit(ref_bottleneck_nhwc)(x, params))

    assert out.shape == (batch, hw, hw, planes * 4), out.shape
    max_err = float(jnp.max(jnp.abs(out - ref)))
    assert max_err < 1e-3, max_err
    print("KERNEL_OK")
</pallas_src>

<mosaic_0001>
module attributes {stable_mosaic.version = 11 : i64} {
  func.func @_bottleneck_kernel(%arg0: i32, %arg1: i32, %arg2: memref<1x8x16x16xf32, #tpu.memory_space<vmem>>, %arg3: memref<1x1x2x16x16xf32, #tpu.memory_space<vmem>>, %arg4: memref<16x4xf32, #tpu.memory_space<vmem>>, %arg5: memref<1x4xf32, #tpu.memory_space<vmem>>, %arg6: memref<36x4xf32, #tpu.memory_space<vmem>>, %arg7: memref<1x4xf32, #tpu.memory_space<vmem>>, %arg8: memref<4x16xf32, #tpu.memory_space<vmem>>, %arg9: memref<1x16xf32, #tpu.memory_space<vmem>>, %arg10: memref<1x128x16xf32, #tpu.memory_space<vmem>>) attributes {dimension_semantics = [#tpu.dimension_semantics<parallel>, #tpu.dimension_semantics<parallel>], iteration_bounds = array<i64: 2, 2>, scalar_prefetch = 0 : i64, scratch_operands = 0 : i64, tpu.core_type = #tpu.core_type<tc>, window_params = [{transform_indices = @transform_0, window_bounds = array<i64: 1, 8, 16, 16>}, {transform_indices = @transform_1, window_bounds = array<i64: 1, 1, 2, 16, 16>}, {pipeline_mode = #tpu.pipeline_mode<synchronous>, transform_indices = @transform_2, window_bounds = array<i64: 16, 4>}, {pipeline_mode = #tpu.pipeline_mode<synchronous>, transform_indices = @transform_3, window_bounds = array<i64: 1, 4>}, {pipeline_mode = #tpu.pipeline_mode<synchronous>, transform_indices = @transform_4, window_bounds = array<i64: 36, 4>}, {pipeline_mode = #tpu.pipeline_mode<synchronous>, transform_indices = @transform_5, window_bounds = array<i64: 1, 4>}, {pipeline_mode = #tpu.pipeline_mode<synchronous>, transform_indices = @transform_6, window_bounds = array<i64: 4, 16>}, {pipeline_mode = #tpu.pipeline_mode<synchronous>, transform_indices = @transform_7, window_bounds = array<i64: 1, 16>}, {transform_indices = @transform_8, window_bounds = array<i64: 1, 128, 16>}]} {
    %c0 = arith.constant 0 : index
    %c0_0 = arith.constant 0 : index
    %c0_1 = arith.constant 0 : index
    %c0_2 = arith.constant 0 : index
    %0 = vector.load %arg2[%c0, %c0_0, %c0_1, %c0_2] : memref<1x8x16x16xf32, #tpu.memory_space<vmem>>, vector<1x8x16x16xf32>
    %1 = vector.shape_cast %0 : vector<1x8x16x16xf32> to vector<8x16x16xf32>
    %c0_3 = arith.constant 0 : index
    %c0_4 = arith.constant 0 : index
    %c0_5 = arith.constant 0 : index
    %c0_6 = arith.constant 0 : index
    %c0_7 = arith.constant 0 : index
    %2 = vector.load %arg3[%c0_3, %c0_4, %c0_5, %c0_6, %c0_7] : memref<1x1x2x16x16xf32, #tpu.memory_space<vmem>>, vector<1x1x2x16x16xf32>
    %3 = vector.shape_cast %2 : vector<1x1x2x16x16xf32> to vector<2x16x16xf32>
    %4 = vector.extract_strided_slice %3 {offsets = [0, 0, 0], sizes = [1, 16, 16], strides = [1, 1, 1]} : vector<2x16x16xf32> to vector<1x16x16xf32>
    %5 = vector.extract_strided_slice %3 {offsets = [1, 0, 0], sizes = [1, 16, 16], strides = [1, 1, 1]} : vector<2x16x16xf32> to vector<1x16x16xf32>
    %6 = tpu.concatenate %4, %1, %5 in 0 : vector<1x16x16xf32>, vector<8x16x16xf32>, vector<1x16x16xf32> -> vector<10x16x16xf32>
    %7 = vector.shape_cast %6 : vector<10x16x16xf32> to vector<160x16xf32>
    %c0_8 = arith.constant 0 : index
    %c0_9 = arith.constant 0 : index
    %8 = vector.load %arg4[%c0_8, %c0_9] : memref<16x4xf32, #tpu.memory_space<vmem>>, vector<16x4xf32>
    %cst = arith.constant dense<0.000000e+00> : vector<160x4xf32>
    %9 = tpu.matmul %7, %8, %cst {dimension_numbers = #tpu.dot_dimension_numbers<[1], [0], [0], [1], [0, 0, 1, 1], [], []>} : vector<160x16xf32>, vector<16x4xf32>, vector<160x4xf32> -> vector<160x4xf32>
    %c0_10 = arith.constant 0 : index
    %c0_11 = arith.constant 0 : index
    %10 = vector.load %arg5[%c0_10, %c0_11] : memref<1x4xf32, #tpu.memory_space<vmem>>, vector<1x4xf32>
    %11 = vector.broadcast %10 : vector<1x4xf32> to vector<160x4xf32>
    %12 = arith.addf %9, %11 : vector<160x4xf32>
    %cst_12 = arith.constant 0.000000e+00 : f32
    %13 = vector.broadcast %cst_12 : f32 to vector<160x4xf32>
    %14 = arith.maximumf %12, %13 : vector<160x4xf32>
    %15 = vector.shape_cast %14 : vector<160x4xf32> to vector<10x16x4xf32>
    %16 = tpu.iota {dimensions = array<i32: 0>} : vector<10x16x4xi32>
    %c0_i32 = arith.constant 0 : i32
    %17 = vector.broadcast %c0_i32 : i32 to vector<10x16x4xi32>
    %18 = arith.cmpi eq, %16, %17 : vector<10x16x4xi32>
    %c0_i32_13 = arith.constant 0 : i32
    %19 = arith.cmpi eq, %arg1, %c0_i32_13 : i32
    %20 = vector.broadcast %19 : i1 to vector<10x16x4xi1>
    %21 = arith.andi %18, %20 : vector<10x16x4xi1>
    %c9_i32 = arith.constant 9 : i32
    %22 = vector.broadcast %c9_i32 : i32 to vector<10x16x4xi32>
    %23 = arith.cmpi eq, %16, %22 : vector<10x16x4xi32>
    %c1_i32 = arith.constant 1 : i32
    %24 = arith.cmpi eq, %arg1, %c1_i32 : i32
    %25 = vector.broadcast %24 : i1 to vector<10x16x4xi1>
    %26 = arith.andi %23, %25 : vector<10x16x4xi1>
    %27 = arith.ori %21, %26 : vector<10x16x4xi1>
    %cst_14 = arith.constant 0.000000e+00 : f32
    %28 = vector.broadcast %cst_14 : f32 to vector<10x16x4xf32>
    %29 = arith.select %27, %28, %15 : vector<10x16x4xi1>, vector<10x16x4xf32>
    %cst_15 = arith.constant 0.000000e+00 : f32
    %30 = vector.broadcast %cst_15 : f32 to vector<10x1x4xf32>
    %31 = tpu.concatenate %30, %29, %30 in 1 : vector<10x1x4xf32>, vector<10x16x4xf32>, vector<10x1x4xf32> -> vector<10x18x4xf32>
    %32 = vector.extract_strided_slice %31 {offsets = [0, 0, 0], sizes = [8, 16, 4], strides = [1, 1, 1]} : vector<10x18x4xf32> to vector<8x16x4xf32>
    %33 = vector.shape_cast %32 : vector<8x16x4xf32> to vector<128x4xf32>
    %34 = vector.extract_strided_slice %31 {offsets = [0, 1, 0], sizes = [8, 16, 4], strides = [1, 1, 1]} : vector<10x18x4xf32> to vector<8x16x4xf32>
    %35 = vector.shape_cast %34 : vector<8x16x4xf32> to vector<128x4xf32>
    %36 = vector.extract_strided_slice %31 {offsets = [0, 2, 0], sizes = [8, 16, 4], strides = [1, 1, 1]} : vector<10x18x4xf32> to vector<8x16x4xf32>
    %37 = vector.shape_cast %36 : vector<8x16x4xf32> to vector<128x4xf32>
    %38 = vector.extract_strided_slice %31 {offsets = [1, 0, 0], sizes = [8, 16, 4], strides = [1, 1, 1]} : vector<10x18x4xf32> to vector<8x16x4xf32>
    %39 = vector.shape_cast %38 : vector<8x16x4xf32> to vector<128x4xf32>
    %40 = vector.extract_strided_slice %31 {offsets = [1, 1, 0], sizes = [8, 16, 4], strides = [1, 1, 1]} : vector<10x18x4xf32> to vector<8x16x4xf32>
    %41 = vector.shape_cast %40 : vector<8x16x4xf32> to vector<128x4xf32>
    %42 = vector.extract_strided_slice %31 {offsets = [1, 2, 0], sizes = [8, 16, 4], strides = [1, 1, 1]} : vector<10x18x4xf32> to vector<8x16x4xf32>
    %43 = vector.shape_cast %42 : vector<8x16x4xf32> to vector<128x4xf32>
    %44 = vector.extract_strided_slice %31 {offsets = [2, 0, 0], sizes = [8, 16, 4], strides = [1, 1, 1]} : vector<10x18x4xf32> to vector<8x16x4xf32>
    %45 = vector.shape_cast %44 : vector<8x16x4xf32> to vector<128x4xf32>
    %46 = vector.extract_strided_slice %31 {offsets = [2, 1, 0], sizes = [8, 16, 4], strides = [1, 1, 1]} : vector<10x18x4xf32> to vector<8x16x4xf32>
    %47 = vector.shape_cast %46 : vector<8x16x4xf32> to vector<128x4xf32>
    %48 = vector.extract_strided_slice %31 {offsets = [2, 2, 0], sizes = [8, 16, 4], strides = [1, 1, 1]} : vector<10x18x4xf32> to vector<8x16x4xf32>
    %49 = vector.shape_cast %48 : vector<8x16x4xf32> to vector<128x4xf32>
    %50 = tpu.concatenate %33, %35, %37, %39, %41, %43, %45, %47, %49 in 1 : vector<128x4xf32>, vector<128x4xf32>, vector<128x4xf32>, vector<128x4xf32>, vector<128x4xf32>, vector<128x4xf32>, vector<128x4xf32>, vector<128x4xf32>, vector<128x4xf32> -> vector<128x36xf32>
    %c0_16 = arith.constant 0 : index
    %c0_17 = arith.constant 0 : index
    %51 = vector.load %arg6[%c0_16, %c0_17] : memref<36x4xf32, #tpu.memory_space<vmem>>, vector<36x4xf32>
    %cst_18 = arith.constant dense<0.000000e+00> : vector<128x4xf32>
    %52 = tpu.matmul %50, %51, %cst_18 {dimension_numbers = #tpu.dot_dimension_numbers<[1], [0], [0], [1], [0, 0, 1, 1], [], []>} : vector<128x36xf32>, vector<36x4xf32>, vector<128x4xf32> -> vector<128x4xf32>
    %c0_19 = arith.constant 0 : index
    %c0_20 = arith.constant 0 : index
    %53 = vector.load %arg7[%c0_19, %c0_20] : memref<1x4xf32, #tpu.memory_space<vmem>>, vector<1x4xf32>
    %54 = vector.broadcast %53 : vector<1x4xf32> to vector<128x4xf32>
    %55 = arith.addf %52, %54 : vector<128x4xf32>
    %cst_21 = arith.constant 0.000000e+00 : f32
    %56 = vector.broadcast %cst_21 : f32 to vector<128x4xf32>
    %57 = arith.maximumf %55, %56 : vector<128x4xf32>
    %c0_22 = arith.constant 0 : index
    %c0_23 = arith.constant 0 : index
    %58 = vector.load %arg8[%c0_22, %c0_23] : memref<4x16xf32, #tpu.memory_space<vmem>>, vector<4x16xf32>
    %cst_24 = arith.constant dense<0.000000e+00> : vector<128x16xf32>
    %59 = tpu.matmul %57, %58, %cst_24 {dimension_numbers = #tpu.dot_dimension_numbers<[1], [0], [0], [1], [0, 0, 1, 1], [], []>} : vector<128x4xf32>, vector<4x16xf32>, vector<128x16xf32> -> vector<128x16xf32>
    %60 = vector.shape_cast %1 : vector<8x16x16xf32> to vector<128x16xf32>
    %c0_25 = arith.constant 0 : index
    %c0_26 = arith.constant 0 : index
    %61 = vector.load %arg9[%c0_25, %c0_26] : memref<1x16xf32, #tpu.memory_space<vmem>>, vector<1x16xf32>
    %62 = vector.broadcast %61 : vector<1x16xf32> to vector<128x16xf32>
    %63 = arith.addf %59, %62 : vector<128x16xf32>
    %64 = arith.addf %63, %60 : vector<128x16xf32>
    %cst_27 = arith.constant 0.000000e+00 : f32
    %65 = vector.broadcast %cst_27 : f32 to vector<128x16xf32>
    %66 = arith.maximumf %64, %65 : vector<128x16xf32>
    %c0_28 = arith.constant 0 : index
    %c0_29 = arith.constant 0 : index
    %c0_30 = arith.constant 0 : index
    %67 = vector.load %arg10[%c0_28, %c0_29, %c0_30] : memref<1x128x16xf32, #tpu.memory_space<vmem>>, vector<1x128x16xf32>
    %68 = vector.shape_cast %67 : vector<1x128x16xf32> to vector<128x16xf32>
    %69 = vector.shape_cast %66 : vector<128x16xf32> to vector<1x128x16xf32>
    tpu.vector_store %arg10[%c0_28, %c0_29, %c0_30], %69 {strides = array<i32>} : memref<1x128x16xf32, #tpu.memory_space<vmem>>, vector<1x128x16xf32>,
    return
  }
  func.func @transform_0(%arg0: i32, %arg1: i32) -> (i32, i32, i32, i32) {
    %c0_i32 = arith.constant 0 : i32
    %c0_i32_0 = arith.constant 0 : i32
    %c0_i32_1 = arith.constant 0 : i32
    return %arg0, %arg1, %c0_i32, %c0_i32_0 : i32, i32, i32, i32
  }
  func.func @transform_1(%arg0: i32, %arg1: i32) -> (i32, i32, i32, i32, i32) {
    %c0_i32 = arith.constant 0 : i32
    %c0_i32_0 = arith.constant 0 : i32
    %c0_i32_1 = arith.constant 0 : i32
    %c0_i32_2 = arith.constant 0 : i32
    return %arg0, %arg1, %c0_i32, %c0_i32_0, %c0_i32_1 : i32, i32, i32, i32, i32
  }
  func.func @transform_2(%arg0: i32, %arg1: i32) -> (i32, i32) {
    %c0_i32 = arith.constant 0 : i32
    %c0_i32_0 = arith.constant 0 : i32
    %c0_i32_1 = arith.constant 0 : i32
    return %c0_i32, %c0_i32_0 : i32, i32
  }
  func.func @transform_3(%arg0: i32, %arg1: i32) -> (i32, i32) {
    %c0_i32 = arith.constant 0 : i32
    %c0_i32_0 = arith.constant 0 : i32
    %c0_i32_1 = arith.constant 0 : i32
    return %c0_i32, %c0_i32_0 : i32, i32
  }
  func.func @transform_4(%arg0: i32, %arg1: i32) -> (i32, i32) {
    %c0_i32 = arith.constant 0 : i32
    %c0_i32_0 = arith.constant 0 : i32
    %c0_i32_1 = arith.constant 0 : i32
    return %c0_i32, %c0_i32_0 : i32, i32
  }
  func.func @transform_5(%arg0: i32, %arg1: i32) -> (i32, i32) {
    %c0_i32 = arith.constant 0 : i32
    %c0_i32_0 = arith.constant 0 : i32
    %c0_i32_1 = arith.constant 0 : i32
    return %c0_i32, %c0_i32_0 : i32, i32
  }
  func.func @transform_6(%arg0: i32, %arg1: i32) -> (i32, i32) {
    %c0_i32 = arith.constant 0 : i32
    %c0_i32_0 = arith.constant 0 : i32
    %c0_i32_1 = arith.constant 0 : i32
    return %c0_i32, %c0_i32_0 : i32, i32
  }
  func.func @transform_7(%arg0: i32, %arg1: i32) -> (i32, i32) {
    %c0_i32 = arith.constant 0 : i32
    %c0_i32_0 = arith.constant 0 : i32
    %c0_i32_1 = arith.constant 0 : i32
    return %c0_i32, %c0_i32_0 : i32, i32
  }
  func.func @transform_8(%arg0: i32, %arg1: i32) -> (i32, i32, i32) {
    %c0_i32 = arith.constant 0 : i32
    %c0_i32_0 = arith.constant 0 : i32
    return %arg0, %arg1, %c0_i32 : i32, i32, i32
  }
}

</mosaic_0001>

<llo_original>
// kernel: bottleneck_forward_nhwc.1
$region0: #{bottleneck_forward_nhwc.1}
  #allocation0 [shape = 'u32[]', space=smem, size = 0x4, offset = 0x4, fixed_abs, tag = 'smem constant byte address 0x4 - core index']
  #allocation1 [shape = 'u32[72,128]{1,0:T(1,128)}', space=vmem, size = 0x9000, scoped, tag = 'internal scratch']
  %s0 = inlined_call_operand.vmem [shape: f32[2,16,16,16], index: 0, kind: input, shape index: {}]
  %s1 = inlined_call_operand.vmem [shape: f32[2,2,2,16,16], index: 1, kind: input, shape index: {}]
  %s2 = inlined_call_operand.vmem [shape: f32[16,4], index: 2, kind: input, shape index: {}]
  %s3 = inlined_call_operand.vmem [shape: f32[1,4], index: 3, kind: input, shape index: {}]
  %s4 = inlined_call_operand.vmem [shape: f32[36,4], index: 4, kind: input, shape index: {}]
  %s5 = inlined_call_operand.vmem [shape: f32[1,4], index: 5, kind: input, shape index: {}]
  %s6 = inlined_call_operand.vmem [shape: f32[4,16], index: 6, kind: input, shape index: {}]
  %s7 = inlined_call_operand.vmem [shape: f32[1,16], index: 7, kind: input, shape index: {}]
  %s8 = inlined_call_operand.hbm [shape: f32[2,256,16], index: 8, kind: output, shape index: {}]
  %s9 = sld [smem:[#allocation0]]
  $region65: #{bottleneck_forward_nhwc.1} parent=0
    _
  %s11 = ssub.s32 1, %s9
  %s12 = scalar_select 0, %s11, %s9
  $region1: #{bottleneck_forward_nhwc.1} parent=0
    #allocation2 [shape = 'u8[131072]{0}', space=vmem, size = 0x20000, scoped, tag = 'output window, operand 0']
    #allocation3 [shape = 's32[2]{0}', space=sflag, size = 0x8, scoped, tag = 'scoped memory for bottleneck_forward_nhwc.1']
    %13 = vsyncpa [#allocation3], 0
    %s14 = scalar_lea.sflag [#allocation3], 1
    %15 = vsyncpa %s14, 0
    loop: start=0, step=1, limit=6
    $region2: #{bottleneck_forward_nhwc.1} parent=1 // loop_pre_header
      _
    $region3: #{bottleneck_forward_nhwc.1} parent=1 // loop_header
      %s17 = sphi 0, %s21
      %p18 = scmp.ge.s32.totalorder %s17, 6
      %s24 = sphi 0, %s36
      %s25 = sphi 0, %s32
      %s26 = sphi 0, %s24
      %s27 = sphi 0, %s25
      %s28 = sphi 0, %s26
      %s29 = sphi 0, %s27
      %s41 = sphi 0, %s43
      %s44 = sphi 0, %s41
      %s45 = sphi 0, %s44
      %s61 = sphi 0, %s45
      %s69 = sphi 0, %s71
      %s72 = sphi 0, %s69
      %s73 = sphi 0, %s72
      %s89 = sphi 0, %s73
      %s93 = sphi 0, %s93
      %s95 = sphi 0, %s93
      %s96 = sphi 0, %s95
      %s110 = sphi 0, %s96
      %s114 = sphi 0, %s114
      %s116 = sphi 0, %s114
      %s117 = sphi 0, %s116
      %s131 = sphi 0, %s117
      %s135 = sphi 0, %s135
      %s137 = sphi 0, %s135
      %s138 = sphi 0, %s137
      %s152 = sphi 0, %s138
      %s156 = sphi 0, %s156
      %s158 = sphi 0, %s156
      %s159 = sphi 0, %s158
      %s173 = sphi 0, %s159
      %s177 = sphi 0, %s177
      %s179 = sphi 0, %s177
      %s180 = sphi 0, %s179
      %s194 = sphi 0, %s180
      %s198 = sphi 0, %s198
      %s200 = sphi 0, %s198
      %s201 = sphi 0, %s200
      %s215 = sphi 0, %s201
      %s223 = sphi 0, %s225
      %s226 = sphi 0, %s223
      %s227 = sphi 0, %s226
      %s243 = sphi 0, %s227
    $region4: #{bottleneck_forward_nhwc.1} parent=1 // loop_header_branch
      %20 = sbr.rel (%p18) target = $region8
    $region5: #{bottleneck_forward_nhwc.1} parent=1 // loop_body
      %s22 = ssub.s32 %s17, 1
      %s23 = ssub.s32 %s17, 2
      %s30 = sadd.s32 1, %s25
      %p31 = scmp.ge.s32.totalorder %s30, 2
      %s32 = scalar_select %p31, 0, %s30
      %s33 = sadd.s32 1, %s24
      %s34 = scalar_select %p31, %s33, %s24
      %p35 = scmp.ge.s32.totalorder %s34, 2
      %s36 = scalar_select %p35, 0, %s34
      %s37 = ssub.s32 %s24, %s36
      %s38 = ssub.s32 %s25, %s32
      %s39 = sor.u32 %s37, %s38
      %p40 = scmp.eq.s32.totalorder %s39, 0
      %s42 = sadd.s32 %s41, 1
      %s43 = scalar_select %p40, %s41, %s42
      %p46 = pneg %p40
      %p47 = scmp.eq.s32.totalorder %s17, 3
      %p48 = por %p46, %p47
      %p49 = scmp.ne.s32.totalorder %s41, %s44
      %p50 = scmp.eq.s32.totalorder %s17, 0
      %p51 = por %p49, %p50
      %p52 = scmp.ne.s32.totalorder %s41, %s44
      %p53 = scmp.eq.s32.totalorder %s22, 3
      %p54 = por %p52, %p53
      %p55 = scmp.ne.s32.totalorder %s44, %s45
      %p56 = scmp.eq.s32.totalorder %s22, 0
      %p57 = por %p55, %p56
      %p58 = scmp.ne.s32.totalorder %s44, %s45
      %p59 = scmp.eq.s32.totalorder %s23, 3
      %p60 = por %p58, %p59
      %p62 = scmp.ne.s32.totalorder %s45, %s61
      %p63 = scmp.eq.s32.totalorder %s23, 0
      %p64 = por %p62, %p63
      %s65 = ssub.s32 %s24, %s36
      %s66 = ssub.s32 %s25, %s32
      %s67 = sor.u32 %s65, %s66
      %p68 = scmp.eq.s32.totalorder %s67, 0
      %s70 = sadd.s32 %s69, 1
      %s71 = scalar_select %p68, %s69, %s70
      %p74 = pneg %p68
      %p75 = scmp.eq.s32.totalorder %s17, 3
      %p76 = por %p74, %p75
      %p77 = scmp.ne.s32.totalorder %s69, %s72
      %p78 = scmp.eq.s32.totalorder %s17, 0
      %p79 = por %p77, %p78
      %p80 = scmp.ne.s32.totalorder %s69, %s72
      %p81 = scmp.eq.s32.totalorder %s22, 3
      %p82 = por %p80, %p81
      %p83 = scmp.ne.s32.totalorder %s72, %s73
      %p84 = scmp.eq.s32.totalorder %s22, 0
      %p85 = por %p83, %p84
      %p86 = scmp.ne.s32.totalorder %s72, %s73
      %p87 = scmp.eq.s32.totalorder %s23, 3
      %p88 = por %p86, %p87
      %p90 = scmp.ne.s32.totalorder %s73, %s89
      %p91 = scmp.eq.s32.totalorder %s23, 0
      %p92 = por %p90, %p91
      %s94 = sadd.s32 %s93, 1
      %p97 = scmp.eq.s32.totalorder %s17, 3
      %p98 = scmp.ne.s32.totalorder %s93, %s95
      %p99 = scmp.eq.s32.totalorder %s17, 0
      %p100 = por %p98, %p99
      %p101 = scmp.ne.s32.totalorder %s93, %s95
      %p102 = scmp.eq.s32.totalorder %s22, 3
      %p103 = por %p101, %p102
      %p104 = scmp.ne.s32.totalorder %s95, %s96
      %p105 = scmp.eq.s32.totalorder %s22, 0
      %p106 = por %p104, %p105
      %p107 = scmp.ne.s32.totalorder %s95, %s96
      %p108 = scmp.eq.s32.totalorder %s23, 3
      %p109 = por %p107, %p108
      %p111 = scmp.ne.s32.totalorder %s96, %s110
      %p112 = scmp.eq.s32.totalorder %s23, 0
      %p113 = por %p111, %p112
      %s115 = sadd.s32 %s114, 1
      %p118 = scmp.eq.s32.totalorder %s17, 3
      %p119 = scmp.ne.s32.totalorder %s114, %s116
      %p120 = scmp.eq.s32.totalorder %s17, 0
      %p121 = por %p119, %p120
      %p122 = scmp.ne.s32.totalorder %s114, %s116
      %p123 = scmp.eq.s32.totalorder %s22, 3
      %p124 = por %p122, %p123
      %p125 = scmp.ne.s32.totalorder %s116, %s117
      %p126 = scmp.eq.s32.totalorder %s22, 0
      %p127 = por %p125, %p126
      %p128 = scmp.ne.s32.totalorder %s116, %s117
      %p129 = scmp.eq.s32.totalorder %s23, 3
      %p130 = por %p128, %p129
      %p132 = scmp.ne.s32.totalorder %s117, %s131
      %p133 = scmp.eq.s32.totalorder %s23, 0
      %p134 = por %p132, %p133
      %s136 = sadd.s32 %s135, 1
      %p139 = scmp.eq.s32.totalorder %s17, 3
      %p140 = scmp.ne.s32.totalorder %s135, %s137
      %p141 = scmp.eq.s32.totalorder %s17, 0
      %p142 = por %p140, %p141
      %p143 = scmp.ne.s32.totalorder %s135, %s137
      %p144 = scmp.eq.s32.totalorder %s22, 3
      %p145 = por %p143, %p144
      %p146 = scmp.ne.s32.totalorder %s137, %s138
      %p147 = scmp.eq.s32.totalorder %s22, 0
      %p148 = por %p146, %p147
      %p149 = scmp.ne.s32.totalorder %s137, %s138
      %p150 = scmp.eq.s32.totalorder %s23, 3
      %p151 = por %p149, %p150
      %p153 = scmp.ne.s32.totalorder %s138, %s152
      %p154 = scmp.eq.s32.totalorder %s23, 0
      %p155 = por %p153, %p154
      %s157 = sadd.s32 %s156, 1
      %p160 = scmp.eq.s32.totalorder %s17, 3
      %p161 = scmp.ne.s32.totalorder %s156, %s158
      %p162 = scmp.eq.s32.totalorder %s17, 0
      %p163 = por %p161, %p162
      %p164 = scmp.ne.s32.totalorder %s156, %s158
      %p165 = scmp.eq.s32.totalorder %s22, 3
      %p166 = por %p164, %p165
      %p167 = scmp.ne.s32.totalorder %s158, %s159
      %p168 = scmp.eq.s32.totalorder %s22, 0
      %p169 = por %p167, %p168
      %p170 = scmp.ne.s32.totalorder %s158, %s159
      %p171 = scmp.eq.s32.totalorder %s23, 3
      %p172 = por %p170, %p171
      %p174 = scmp.ne.s32.totalorder %s159, %s173
      %p175 = scmp.eq.s32.totalorder %s23, 0
      %p176 = por %p174, %p175
      %s178 = sadd.s32 %s177, 1
      %p181 = scmp.eq.s32.totalorder %s17, 3
      %p182 = scmp.ne.s32.totalorder %s177, %s179
      %p183 = scmp.eq.s32.totalorder %s17, 0
      %p184 = por %p182, %p183
      %p185 = scmp.ne.s32.totalorder %s177, %s179
      %p186 = scmp.eq.s32.totalorder %s22, 3
      %p187 = por %p185, %p186
      %p188 = scmp.ne.s32.totalorder %s179, %s180
      %p189 = scmp.eq.s32.totalorder %s22, 0
      %p190 = por %p188, %p189
      %p191 = scmp.ne.s32.totalorder %s179, %s180
      %p192 = scmp.eq.s32.totalorder %s23, 3
      %p193 = por %p191, %p192
      %p195 = scmp.ne.s32.totalorder %s180, %s194
      %p196 = scmp.eq.s32.totalorder %s23, 0
      %p197 = por %p195, %p196
      %s199 = sadd.s32 %s198, 1
      %p202 = scmp.eq.s32.totalorder %s17, 3
      %p203 = scmp.ne.s32.totalorder %s198, %s200
      %p204 = scmp.eq.s32.totalorder %s17, 0
      %p205 = por %p203, %p204
      %p206 = scmp.ne.s32.totalorder %s198, %s200
      %p207 = scmp.eq.s32.totalorder %s22, 3
      %p208 = por %p206, %p207
      %p209 = scmp.ne.s32.totalorder %s200, %s201
      %p210 = scmp.eq.s32.totalorder %s22, 0
      %p211 = por %p209, %p210
      %p212 = scmp.ne.s32.totalorder %s200, %s201
      %p213 = scmp.eq.s32.totalorder %s23, 3
      %p214 = por %p212, %p213
      %p216 = scmp.ne.s32.totalorder %s201, %s215
      %p217 = scmp.eq.s32.totalorder %s23, 0
      %p218 = por %p216, %p217
      %s219 = ssub.s32 %s24, %s36
      %s220 = ssub.s32 %s25, %s32
      %s221 = sor.u32 %s219, %s220
      %p222 = scmp.eq.s32.totalorder %s221, 0
      %s224 = sadd.s32 %s223, 1
      %s225 = scalar_select %p222, %s223, %s224
      %p228 = pneg %p222
      %p229 = scmp.eq.s32.totalorder %s17, 3
      %p230 = por %p228, %p229
      %p231 = scmp.ne.s32.totalorder %s223, %s226
      %p232 = scmp.eq.s32.totalorder %s17, 0
      %p233 = por %p231, %p232
      %p234 = scmp.ne.s32.totalorder %s223, %s226
      %p235 = scmp.eq.s32.totalorder %s22, 3
      %p236 = por %p234, %p235
      %p237 = scmp.ne.s32.totalorder %s226, %s227
      %p238 = scmp.eq.s32.totalorder %s22, 0
      %p239 = por %p237, %p238
      %p240 = scmp.ne.s32.totalorder %s226, %s227
      %p241 = scmp.eq.s32.totalorder %s23, 3
      %p242 = por %p240, %p241
      %p244 = scmp.ne.s32.totalorder %s227, %s243
      %p245 = scmp.eq.s32.totalorder %s23, 0
      %p246 = por %p244, %p245
      %p247 = scmp.le.s32.totalorder 1, %s17
      %p248 = scmp.lt.s32.totalorder %s17, 5
      %p249 = pnand %p247, %p248
      %p250 = pneg %p249
      // Predicated region
      $region9: #{bottleneck_forward_nhwc.1} parent=5 // pred_check
        _
      $region10: #{bottleneck_forward_nhwc.1} parent=5 // pred_check_branch
        %252 = sbr.rel (%p249) target = $region12
      $region11: #{bottleneck_forward_nhwc.1} parent=5 // pred_region
        %s253 = ssub.s32 %s17, 1
        // Predicated region
        $region13: #{bottleneck_forward_nhwc.1} parent=11 // pred_check
          %p254 = pneg %p106
        $region14: #{bottleneck_forward_nhwc.1} parent=11 // pred_check_branch
          %256 = sbr.rel (%p254) target = $region16
        $region15: #{bottleneck_forward_nhwc.1} parent=11 // pred_region
          _
        $region16: #{bottleneck_forward_nhwc.1} parent=11 // pred_fallthru
          _
        // Predicated region
        $region17: #{bottleneck_forward_nhwc.1} parent=11 // pred_check
          %p257 = pneg %p127
        $region18: #{bottleneck_forward_nhwc.1} parent=11 // pred_check_branch
          %259 = sbr.rel (%p257) target = $region20
        $region19: #{bottleneck_forward_nhwc.1} parent=11 // pred_region
          _
        $region20: #{bottleneck_forward_nhwc.1} parent=11 // pred_fallthru
          _
        // Predicated region
        $region21: #{bottleneck_forward_nhwc.1} parent=11 // pred_check
          %p260 = pneg %p148
        $region22: #{bottleneck_forward_nhwc.1} parent=11 // pred_check_branch
          %262 = sbr.rel (%p260) target = $region24
        $region23: #{bottleneck_forward_nhwc.1} parent=11 // pred_region
          _
        $region24: #{bottleneck_forward_nhwc.1} parent=11 // pred_fallthru
          _
        // Predicated region
        $region25: #{bottleneck_forward_nhwc.1} parent=11 // pred_check
          %p263 = pneg %p169
        $region26: #{bottleneck_forward_nhwc.1} parent=11 // pred_check_branch
          %265 = sbr.rel (%p263) target = $region28
        $region27: #{bottleneck_forward_nhwc.1} parent=11 // pred_region
          _
        $region28: #{bottleneck_forward_nhwc.1} parent=11 // pred_fallthru
          _
        // Predicated region
        $region29: #{bottleneck_forward_nhwc.1} parent=11 // pred_check
          %p266 = pneg %p190
        $region30: #{bottleneck_forward_nhwc.1} parent=11 // pred_check_branch
          %268 = sbr.rel (%p266) target = $region32
        $region31: #{bottleneck_forward_nhwc.1} parent=11 // pred_region
          _
        $region32: #{bottleneck_forward_nhwc.1} parent=11 // pred_fallthru
          _
        // Predicated region
        $region33: #{bottleneck_forward_nhwc.1} parent=11 // pred_check
          %p269 = pneg %p211
        $region34: #{bottleneck_forward_nhwc.1} parent=11 // pred_check_branch
          %271 = sbr.rel (%p269) target = $region36
        $region35: #{bottleneck_forward_nhwc.1} parent=11 // pred_region
          _
        $region36: #{bottleneck_forward_nhwc.1} parent=11 // pred_fallthru
          _
      $region12: #{bottleneck_forward_nhwc.1} parent=5 // pred_fallthru
        _
      %p272 = scmp.lt.s32.totalorder %s17, 4
      // Predicated region
      $region37: #{bottleneck_forward_nhwc.1} parent=5 // pred_check
        %p273 = pneg %p272
      $region38: #{bottleneck_forward_nhwc.1} parent=5 // pred_check_branch
        %275 = sbr.rel (%p273) target = $region40
      $region39: #{bottleneck_forward_nhwc.1} parent=5 // pred_region
        // Predicated region
        $region41: #{bottleneck_forward_nhwc.1} parent=39 // pred_check
          %p276 = pneg %p51
        $region42: #{bottleneck_forward_nhwc.1} parent=39 // pred_check_branch
          %278 = sbr.rel (%p276) target = $region44
        $region43: #{bottleneck_forward_nhwc.1} parent=39 // pred_region
          %s279 = smul.u32 8, %s25
          %p280 = scmp.lt.s32.totalorder %s24, 1
          %s281 = scalar_select %p280, %s24, 1
          %p282 = scmp.lt.s32.totalorder %s279, 15
          %s283 = scalar_select %p282, %s279, 15
          %s284 = smul.addr %s283, 2
          %s285 = smul.addr %s281, 32
          %s286 = sadd.s32 %s284, %s285
          %s287 = smul.addr %s286, 8
          %s288 = scalar_lea.vmem %s0, %s287
          %s289 = smul.u32 8, %s25
        $region44: #{bottleneck_forward_nhwc.1} parent=39 // pred_fallthru
          _
        // Predicated region
        $region45: #{bottleneck_forward_nhwc.1} parent=39 // pred_check
          %p290 = pneg %p79
        $region46: #{bottleneck_forward_nhwc.1} parent=39 // pred_check_branch
          %292 = sbr.rel (%p290) target = $region48
        $region47: #{bottleneck_forward_nhwc.1} parent=39 // pred_region
          %p293 = scmp.lt.s32.totalorder %s24, 1
          %s294 = scalar_select %p293, %s24, 1
          %p295 = scmp.lt.s32.totalorder %s25, 1
          %s296 = scalar_select %p295, %s25, 1
          %s297 = smul.addr %s296, 4
          %s298 = smul.addr %s294, 8
          %s299 = sadd.s32 %s297, %s298
          %s300 = smul.addr %s299, 8
          %s301 = scalar_lea.vmem %s1, %s300
        $region48: #{bottleneck_forward_nhwc.1} parent=39 // pred_fallthru
          _
      $region40: #{bottleneck_forward_nhwc.1} parent=5 // pred_fallthru
        _
      %p302 = scmp.le.s32.totalorder 1, %s17
      %p303 = scmp.lt.s32.totalorder %s17, 5
      %p304 = pnand %p302, %p303
      %p305 = pneg %p304
      // Predicated region
      $region49: #{bottleneck_forward_nhwc.1} parent=5 // pred_check
        _
      $region50: #{bottleneck_forward_nhwc.1} parent=5 // pred_check_branch
        %307 = sbr.rel (%p304) target = $region52
      $region51: #{bottleneck_forward_nhwc.1} parent=5 // pred_region
        %s308 = ssub.s32 %s17, 1
        %s309 = smul.u32 8, %s27
        %p310 = scmp.lt.s32.totalorder %s26, 1
        %s311 = scalar_select %p310, %s26, 1
        %p312 = scmp.lt.s32.totalorder %s309, 15
        %s313 = scalar_select %p312, %s309, 15
        %s314 = smul.addr %s313, 2
        %s315 = smul.addr %s311, 32
        %s316 = sadd.s32 %s314, %s315
        %s317 = smul.addr %s316, 8
        %s318 = scalar_lea.vmem %s0, %s317
        %p319 = pneg %p57
        %p320 = pneg %p54
        %p321 = scmp.lt.s32.totalorder %s26, 1
        %s322 = scalar_select %p321, %s26, 1
        %p323 = scmp.lt.s32.totalorder %s27, 1
        %s324 = scalar_select %p323, %s27, 1
        %s325 = smul.addr %s324, 4
        %s326 = smul.addr %s322, 8
        %s327 = sadd.s32 %s325, %s326
        %s328 = smul.addr %s327, 8
        %s329 = scalar_lea.vmem %s1, %s328
        %p330 = pneg %p85
        %p331 = pneg %p82
        %p332 = pneg %p106
        %p333 = pneg %p103
        %p334 = pneg %p127
        %p335 = pneg %p124
        %p336 = pneg %p148
        %p337 = pneg %p145
        %p338 = pneg %p169
        %p339 = pneg %p166
        %p340 = pneg %p190
        %p341 = pneg %p187
        %p342 = pneg %p211
        %p343 = pneg %p208
        %p344 = pneg %p239
        %p345 = pneg %p236
        %s346 = sand.u32 %s226, 1
        %s347 = scalar_lea.sflag [#allocation3], %s346
        %s348 = sand.u32 %s226, 1
        %s349 = smul.addr %s348, 128
        %s350 = scalar_lea.vmem [#allocation2], %s349
        %s351 = smul.u32 8, %s27
        %p352 = scmp.lt.s32.totalorder %s26, 1
        %s353 = scalar_select %p352, %s26, 1
        %p354 = scmp.lt.s32.totalorder %s351, 15
        %s355 = scalar_select %p354, %s351, 15
        %s356 = smul.addr %s355, 2
        %s357 = smul.addr %s353, 32
        %s358 = sadd.s32 %s356, %s357
        %s359 = smul.addr %s358, 8
        %s360 = scalar_lea.vmem %s0, %s359
        %s361 = smul.u32 8, %s27
        %p362 = scmp.lt.s32.totalorder %s26, 1
        %s363 = scalar_select %p362, %s26, 1
        %p364 = scmp.lt.s32.totalorder %s27, 1
        %s365 = scalar_select %p364, %s27, 1
        %s366 = smul.addr %s365, 4
        %s367 = smul.addr %s363, 8
        %s368 = sadd.s32 %s366, %s367
        %s369 = smul.addr %s368, 8
        %s370 = scalar_lea.vmem %s1, %s369
        %s371 = smul.u32 16, %s27
        %v372 = vld [vmem:[%s360] sm:$0xff]
        %v373 = vld [vmem:[%s360 + $0x8] sm:$0xff]
        %v374 = vld [vmem:[%s360 + $0x10] sm:$0xff]
        %v375 = vld [vmem:[%s360 + $0x18] sm:$0xff]
        %v376 = vld [vmem:[%s360 + $0x20] sm:$0xff]
        %v377 = vld [vmem:[%s360 + $0x28] sm:$0xff]
        %v378 = vld [vmem:[%s360 + $0x30] sm:$0xff]
        %v379 = vld [vmem:[%s360 + $0x38] sm:$0xff]
        %v380 = vld [vmem:[%s360 + $0x40] sm:$0xff]
        %v381 = vld [vmem:[%s360 + $0x48] sm:$0xff]
        %v382 = vld [vmem:[%s360 + $0x50] sm:$0xff]
        %v383 = vld [vmem:[%s360 + $0x58] sm:$0xff]
        %v384 = vld [vmem:[%s360 + $0x60] sm:$0xff]
        %v385 = vld [vmem:[%s360 + $0x68] sm:$0xff]
        %v386 = vld [vmem:[%s360 + $0x70] sm:$0xff]
        %v387 = vld [vmem:[%s360 + $0x78] sm:$0xff]
        %v388 = vld [vmem:[%s370] sm:$0xff]
        %v389 = vld [vmem:[%s370 + $0x8] sm:$0xff]
        %v390 = vld [vmem:[%s370 + $0x10] sm:$0xff]
        %v391 = vld [vmem:[%s370 + $0x18] sm:$0xff]
        %v392 = vld [vmem:[%s2] sm:$0xff]
        %v393 = vld [vmem:[%s2 + $0x8] sm:$0xff]
        %v394 = vld [vmem:[%s3] sm:$0x1]
        %v396 = vperm.slane %v394, 0
        %vm398 = vcmask 130048
        %v400 = vsel %vm398, %v388, 0
        %v403 = vsel %vm398, %v389, 0
        %v406 = vsel %vm398, %v372, 0
        %v409 = vsel %vm398, %v373, 0
        %v412 = vsel %vm398, %v374, 0
        %v415 = vsel %vm398, %v375, 0
        %v418 = vsel %vm398, %v376, 0
        %v421 = vsel %vm398, %v377, 0
        %v424 = vsel %vm398, %v378, 0
        %v427 = vsel %vm398, %v379, 0
        %v430 = vsel %vm398, %v380, 0
        %v433 = vsel %vm398, %v381, 0
        %v436 = vsel %vm398, %v382, 0
        %v439 = vsel %vm398, %v383, 0
        %v442 = vsel %vm398, %v384, 0
        %v445 = vsel %vm398, %v385, 0
        %v448 = vsel %vm398, %v386, 0
        %v451 = vsel %vm398, %v387, 0
        %v454 = vsel %vm398, %v390, 0
        %v457 = vsel %vm398, %v391, 0
        %459 = vmatpush.msra.mxu0 0.0
        %460 = vmatpush.msra.mxu0 0.0
        %461 = vmatpush.msra.mxu0 0.0
        %462 = vmatpush.msra.mxu0 0.0
        %463 = vmatpush.msra.mxu0 0.0
        %464 = vmatpush.msra.mxu0 0.0
        %465 = vmatpush.msra.mxu0 0.0
        %466 = vmatpush.msra.mxu0 0.0
        %467 = vmatpush.msra.mxu0 0.0
        %468 = vmatpush.msra.mxu0 0.0
        %469 = vmatpush.msra.mxu0 0.0
        %470 = vmatpush.msra.mxu0 0.0
        %471 = vmatpush.msra.mxu0 0.0
        %472 = vmatpush.msra.mxu0 0.0
        %473 = vmatpush.msra.mxu0 %v393
        %474 = vmatpush.msra.mxu0 %v392
        %475 = vmatmul.f32.gmra.mxu0 %v400
        %v476 = vpop.f32.mrf.mxu0
        %v477 = vadd.f32 %v396, %v476
        %478 = vmatmul.f32.gmra.mxu0 %v403
        %v479 = vpop.f32.mrf.mxu0
        %v480 = vadd.f32 %v396, %v479
        %481 = vmatmul.f32.gmra.mxu0 %v406
        %v482 = vpop.f32.mrf.mxu0
        %v483 = vadd.f32 %v396, %v482
        %484 = vmatmul.f32.gmra.mxu0 %v409
        %v485 = vpop.f32.mrf.mxu0
        %v486 = vadd.f32 %v396, %v485
        %487 = vmatmul.f32.gmra.mxu0 %v412
        %v488 = vpop.f32.mrf.mxu0
        %v489 = vadd.f32 %v396, %v488
        %490 = vmatmul.f32.gmra.mxu0 %v415
        %v491 = vpop.f32.mrf.mxu0
        %v492 = vadd.f32 %v396, %v491
        %493 = vmatmul.f32.gmra.mxu0 %v418
        %v494 = vpop.f32.mrf.mxu0
        %v495 = vadd.f32 %v396, %v494
        %496 = vmatmul.f32.gmra.mxu0 %v421
        %v497 = vpop.f32.mrf.mxu0
        %v498 = vadd.f32 %v396, %v497
        %499 = vmatmul.f32.gmra.mxu0 %v424
        %v500 = vpop.f32.mrf.mxu0
        %v501 = vadd.f32 %v396, %v500
        %502 = vmatmul.f32.gmra.mxu0 %v427
        %v503 = vpop.f32.mrf.mxu0
        %v504 = vadd.f32 %v396, %v503
        %505 = vmatmul.f32.gmra.mxu0 %v430
        %v506 = vpop.f32.mrf.mxu0
        %v507 = vadd.f32 %v396, %v506
        %508 = vmatmul.f32.gmra.mxu0 %v433
        %v509 = vpop.f32.mrf.mxu0
        %v510 = vadd.f32 %v396, %v509
        %511 = vmatmul.f32.gmra.mxu0 %v436
        %v512 = vpop.f32.mrf.mxu0
        %v513 = vadd.f32 %v396, %v512
        %514 = vmatmul.f32.gmra.mxu0 %v439
        %v515 = vpop.f32.mrf.mxu0
        %v516 = vadd.f32 %v396, %v515
        %517 = vmatmul.f32.gmra.mxu0 %v442
        %v518 = vpop.f32.mrf.mxu0
        %v519 = vadd.f32 %v396, %v518
        %520 = vmatmul.f32.gmra.mxu0 %v445
        %v521 = vpop.f32.mrf.mxu0
        %v522 = vadd.f32 %v396, %v521
        %523 = vmatmul.f32.gmra.mxu0 %v448
        %v524 = vpop.f32.mrf.mxu0
        %v525 = vadd.f32 %v396, %v524
        %526 = vmatmul.f32.gmra.mxu0 %v451
        %v527 = vpop.f32.mrf.mxu0
        %v528 = vadd.f32 %v396, %v527
        %529 = vmatmul.f32.gmra.mxu0 %v454
        %v530 = vpop.f32.mrf.mxu0
        %v531 = vadd.f32 %v396, %v530
        %532 = vmatmul.f32.gmra.mxu0 %v457
        %v533 = vpop.f32.mrf.mxu0
        %v534 = vadd.f32 %v396, %v533
        %535 = vdwg.mxu0
        %v536 = vmax.f32 %v477, 0.0
        %v537 = vmax.f32 %v480, 0.0
        %v538 = vmax.f32 %v483, 0.0
        %v539 = vmax.f32 %v486, 0.0
        %v540 = vmax.f32 %v489, 0.0
        %v541 = vmax.f32 %v492, 0.0
        %v542 = vmax.f32 %v495, 0.0
        %v543 = vmax.f32 %v498, 0.0
        %v544 = vmax.f32 %v501, 0.0
        %v545 = vmax.f32 %v504, 0.0
        %v546 = vmax.f32 %v507, 0.0
        %v547 = vmax.f32 %v510, 0.0
        %v548 = vmax.f32 %v513, 0.0
        %v549 = vmax.f32 %v516, 0.0
        %v550 = vmax.f32 %v519, 0.0
        %v551 = vmax.f32 %v522, 0.0
        %v552 = vmax.f32 %v525, 0.0
        %v553 = vmax.f32 %v528, 0.0
        %v554 = vmax.f32 %v531, 0.0
        %v555 = vmax.f32 %v534, 0.0
        %p556 = scmp.eq.s32.totalorder %s27, 0
        %s557 = scalar_select %p556, 1, 0
        %v558 = vstv %s557
        %vm559 = vcmp.eq.s32.totalorder %v558, 1
        %p560 = scmp.eq.s32.totalorder %s27, 1
        %s561 = scalar_select %p560, 1, 0
        %v562 = vstv %s561
        %vm563 = vcmp.eq.s32.totalorder %v562, 1
        %v564 = vsel %vm559, 0.0, %v536
        %v565 = vsel %vm559, 0.0, %v537
        %v566 = vsel 0, 0.0, %v538
        %v567 = vsel 0, 0.0, %v539
        %v568 = vsel 0, 0.0, %v540
        %v569 = vsel 0, 0.0, %v541
        %v570 = vsel 0, 0.0, %v542
        %v571 = vsel 0, 0.0, %v543
        %v572 = vsel 0, 0.0, %v544
        %v573 = vsel 0, 0.0, %v545
        %v574 = vsel 0, 0.0, %v546
        %v575 = vsel 0, 0.0, %v547
        %v576 = vsel 0, 0.0, %v548
        %v577 = vsel 0, 0.0, %v549
        %v578 = vsel 0, 0.0, %v550
        %v579 = vsel 0, 0.0, %v551
        %v580 = vsel 0, 0.0, %v552
        %v581 = vsel 0, 0.0, %v553
        %v582 = vsel %vm563, 0.0, %v554
        %v583 = vsel %vm563, 0.0, %v555
        %vm604 = vcmask 1040384
        %v605 = vrot.slane %v564, 7
        %v606 = vrot.slane %v565, 7
        %v607 = vsel %vm604, %v605, %v606
        %v608 = vrot.slane %v566, 7
        %v609 = vrot.slane %v567, 7
        %v610 = vsel %vm604, %v608, %v609
        %v611 = vrot.slane %v568, 7
        %v612 = vrot.slane %v569, 7
        %v613 = vsel %vm604, %v611, %v612
        %v614 = vrot.slane %v570, 7
        %v615 = vrot.slane %v571, 7
        %v616 = vsel %vm604, %v614, %v615
        %v617 = vrot.slane %v572, 7
        %v618 = vrot.slane %v573, 7
        %v619 = vsel %vm604, %v617, %v618
        %v620 = vrot.slane %v574, 7
        %v621 = vrot.slane %v575, 7
        %v622 = vsel %vm604, %v620, %v621
        %v623 = vrot.slane %v576, 7
        %v624 = vrot.slane %v577, 7
        %v625 = vsel %vm604, %v623, %v624
        %v626 = vrot.slane %v578, 7
        %v627 = vrot.slane %v579, 7
        %v628 = vsel %vm604, %v626, %v627
        %v629 = vrot.slane %v580, 7
        %v630 = vrot.slane %v581, 7
        %v631 = vsel %vm604, %v629, %v630
        %v632 = vrot.slane %v582, 7
        %v633 = vrot.slane %v583, 7
        %v634 = vsel %vm604, %v632, %v633
        %v663 = vsel %vm604, 0.0, %v605
        %v664 = vsel %vm604, 0.0, %v608
        %v665 = vsel %vm604, 0.0, %v611
        %v666 = vsel %vm604, 0.0, %v614
        %v667 = vsel %vm604, 0.0, %v617
        %v668 = vsel %vm604, 0.0, %v620
        %v669 = vsel %vm604, 0.0, %v623
        %v670 = vsel %vm604, 0.0, %v626
        %v671 = vsel %vm604, 0.0, %v629
        %v672 = vsel %vm604, 0.0, %v632
        %v673 = vsel %vm604, %v606, 0.0
        %v674 = vsel %vm604, %v609, 0.0
        %v675 = vsel %vm604, %v612, 0.0
        %v676 = vsel %vm604, %v615, 0.0
        %v677 = vsel %vm604, %v618, 0.0
        %v678 = vsel %vm604, %v621, 0.0
        %v679 = vsel %vm604, %v624, 0.0
        %v680 = vsel %vm604, %v627, 0.0
        %v681 = vsel %vm604, %v630, 0.0
        %v682 = vsel %vm604, %v633, 0.0
        %vm699 = vcmask 1046528
        %v700 = vrot.slane %v663, 1
        %v701 = vrot.slane %v607, 1
        %v702 = vsel %vm699, %v700, %v701
        %v703 = vrot.slane %v673, 1
        %v704 = vsel %vm699, %v701, %v703
        %v705 = vrot.slane %v664, 1
        %v706 = vrot.slane %v610, 1
        %v707 = vsel %vm699, %v705, %v706
        %v708 = vrot.slane %v674, 1
        %v709 = vsel %vm699, %v706, %v708
        %v710 = vrot.slane %v665, 1
        %v711 = vrot.slane %v613, 1
        %v712 = vsel %vm699, %v710, %v711
        %v713 = vrot.slane %v675, 1
        %v714 = vsel %vm699, %v711, %v713
        %v715 = vrot.slane %v666, 1
        %v716 = vrot.slane %v616, 1
        %v717 = vsel %vm699, %v715, %v716
        %v718 = vrot.slane %v676, 1
        %v719 = vsel %vm699, %v716, %v718
        %v720 = vrot.slane %v667, 1
        %v721 = vrot.slane %v619, 1
        %v722 = vsel %vm699, %v720, %v721
        %v723 = vrot.slane %v677, 1
        %v724 = vsel %vm699, %v721, %v723
        %v725 = vrot.slane %v668, 1
        %v726 = vrot.slane %v622, 1
        %v727 = vsel %vm699, %v725, %v726
        %v728 = vrot.slane %v678, 1
        %v729 = vsel %vm699, %v726, %v728
        %v730 = vrot.slane %v669, 1
        %v731 = vrot.slane %v625, 1
        %v732 = vsel %vm699, %v730, %v731
        %v733 = vrot.slane %v679, 1
        %v734 = vsel %vm699, %v731, %v733
        %v735 = vrot.slane %v670, 1
        %v736 = vrot.slane %v628, 1
        %v737 = vsel %vm699, %v735, %v736
        %v738 = vrot.slane %v680, 1
        %v739 = vsel %vm699, %v736, %v738
        %vm740 = vcmask 1045504
        %v741 = vrot.slane %v663, 2
        %v742 = vrot.slane %v607, 2
        %v743 = vsel %vm740, %v741, %v742
        %v744 = vrot.slane %v673, 2
        %v745 = vsel %vm740, %v742, %v744
        %v746 = vrot.slane %v664, 2
        %v747 = vrot.slane %v610, 2
        %v748 = vsel %vm740, %v746, %v747
        %v749 = vrot.slane %v674, 2
        %v750 = vsel %vm740, %v747, %v749
        %v751 = vrot.slane %v665, 2
        %v752 = vrot.slane %v613, 2
        %v753 = vsel %vm740, %v751, %v752
        %v754 = vrot.slane %v675, 2
        %v755 = vsel %vm740, %v752, %v754
        %v756 = vrot.slane %v666, 2
        %v757 = vrot.slane %v616, 2
        %v758 = vsel %vm740, %v756, %v757
        %v759 = vrot.slane %v676, 2
        %v760 = vsel %vm740, %v757, %v759
        %v761 = vrot.slane %v667, 2
        %v762 = vrot.slane %v619, 2
        %v763 = vsel %vm740, %v761, %v762
        %v764 = vrot.slane %v677, 2
        %v765 = vsel %vm740, %v762, %v764
        %v766 = vrot.slane %v668, 2
        %v767 = vrot.slane %v622, 2
        %v768 = vsel %vm740, %v766, %v767
        %v769 = vrot.slane %v678, 2
        %v770 = vsel %vm740, %v767, %v769
        %v771 = vrot.slane %v669, 2
        %v772 = vrot.slane %v625, 2
        %v773 = vsel %vm740, %v771, %v772
        %v774 = vrot.slane %v679, 2
        %v775 = vsel %vm740, %v772, %v774
        %v776 = vrot.slane %v670, 2
        %v777 = vrot.slane %v628, 2
        %v778 = vsel %vm740, %v776, %v777
        %v779 = vrot.slane %v680, 2
        %v780 = vsel %vm740, %v777, %v779
        %v783 = vrot.slane %v671, 1
        %v784 = vrot.slane %v631, 1
        %v785 = vsel %vm699, %v783, %v784
        %v786 = vrot.slane %v681, 1
        %v787 = vsel %vm699, %v784, %v786
        %v788 = vrot.slane %v671, 2
        %v789 = vrot.slane %v631, 2
        %v790 = vsel %vm740, %v788, %v789
        %v791 = vrot.slane %v681, 2
        %v792 = vsel %vm740, %v789, %v791
        %v795 = vrot.slane %v672, 1
        %v796 = vrot.slane %v634, 1
        %v797 = vsel %vm699, %v795, %v796
        %v798 = vrot.slane %v682, 1
        %v799 = vsel %vm699, %v796, %v798
        %v800 = vrot.slane %v672, 2
        %v801 = vrot.slane %v634, 2
        %v802 = vsel %vm740, %v800, %v801
        %v803 = vrot.slane %v682, 2
        %v804 = vsel %vm740, %v801, %v803
        %805 = vrot.lane.b32.xlu0 %v702, 4
        %v806 = vpop.permute.xlu0 %805
        %807 = vrot.lane.b32.xlu0 %v704, 4
        %v808 = vpop.permute.xlu0 %807
        %809 = vrot.lane.b32.xlu0 %v707, 4
        %v810 = vpop.permute.xlu0 %809
        %811 = vrot.lane.b32.xlu0 %v709, 4
        %v812 = vpop.permute.xlu0 %811
        %813 = vrot.lane.b32.xlu0 %v712, 4
        %v814 = vpop.permute.xlu0 %813
        %815 = vrot.lane.b32.xlu0 %v714, 4
        %v816 = vpop.permute.xlu0 %815
        %817 = vrot.lane.b32.xlu0 %v717, 4
        %v818 = vpop.permute.xlu0 %817
        %819 = vrot.lane.b32.xlu0 %v719, 4
        %v820 = vpop.permute.xlu0 %819
        %821 = vrot.lane.b32.xlu0 %v722, 4
        %v822 = vpop.permute.xlu0 %821
        %823 = vrot.lane.b32.xlu0 %v724, 4
        %v824 = vpop.permute.xlu0 %823
        %825 = vrot.lane.b32.xlu0 %v727, 4
        %v826 = vpop.permute.xlu0 %825
        %827 = vrot.lane.b32.xlu0 %v729, 4
        %v828 = vpop.permute.xlu0 %827
        %829 = vrot.lane.b32.xlu0 %v732, 4
        %v830 = vpop.permute.xlu0 %829
        %831 = vrot.lane.b32.xlu0 %v734, 4
        %v832 = vpop.permute.xlu0 %831
        %833 = vrot.lane.b32.xlu0 %v737, 4
        %v834 = vpop.permute.xlu0 %833
        %835 = vrot.lane.b32.xlu0 %v739, 4
        %v836 = vpop.permute.xlu0 %835
        %853 = vrot.lane.b32.xlu0 %v743, 8
        %v854 = vpop.permute.xlu0 %853
        %855 = vrot.lane.b32.xlu0 %v745, 8
        %v856 = vpop.permute.xlu0 %855
        %857 = vrot.lane.b32.xlu0 %v748, 8
        %v858 = vpop.permute.xlu0 %857
        %859 = vrot.lane.b32.xlu0 %v750, 8
        %v860 = vpop.permute.xlu0 %859
        %861 = vrot.lane.b32.xlu0 %v753, 8
        %v862 = vpop.permute.xlu0 %861
        %863 = vrot.lane.b32.xlu0 %v755, 8
        %v864 = vpop.permute.xlu0 %863
        %865 = vrot.lane.b32.xlu0 %v758, 8
        %v866 = vpop.permute.xlu0 %865
        %867 = vrot.lane.b32.xlu0 %v760, 8
        %v868 = vpop.permute.xlu0 %867
        %869 = vrot.lane.b32.xlu0 %v763, 8
        %v870 = vpop.permute.xlu0 %869
        %871 = vrot.lane.b32.xlu0 %v765, 8
        %v872 = vpop.permute.xlu0 %871
        %873 = vrot.lane.b32.xlu0 %v768, 8
        %v874 = vpop.permute.xlu0 %873
        %875 = vrot.lane.b32.xlu0 %v770, 8
        %v876 = vpop.permute.xlu0 %875
        %877 = vrot.lane.b32.xlu0 %v773, 8
        %v878 = vpop.permute.xlu0 %877
        %879 = vrot.lane.b32.xlu0 %v775, 8
        %v880 = vpop.permute.xlu0 %879
        %881 = vrot.lane.b32.xlu0 %v778, 8
        %v882 = vpop.permute.xlu0 %881
        %883 = vrot.lane.b32.xlu0 %v780, 8
        %v884 = vpop.permute.xlu0 %883
        %901 = vrot.lane.b32.xlu0 %v664, 12
        %v902 = vpop.permute.xlu0 %901
        %903 = vrot.lane.b32.xlu0 %v610, 12
        %v904 = vpop.permute.xlu0 %903
        %905 = vrot.lane.b32.xlu0 %v665, 12
        %v906 = vpop.permute.xlu0 %905
        %907 = vrot.lane.b32.xlu0 %v613, 12
        %v908 = vpop.permute.xlu0 %907
        %909 = vrot.lane.b32.xlu0 %v666, 12
        %v910 = vpop.permute.xlu0 %909
        %911 = vrot.lane.b32.xlu0 %v616, 12
        %v912 = vpop.permute.xlu0 %911
        %913 = vrot.lane.b32.xlu0 %v667, 12
        %v914 = vpop.permute.xlu0 %913
        %915 = vrot.lane.b32.xlu0 %v619, 12
        %v916 = vpop.permute.xlu0 %915
        %917 = vrot.lane.b32.xlu0 %v668, 12
        %v918 = vpop.permute.xlu0 %917
        %919 = vrot.lane.b32.xlu0 %v622, 12
        %v920 = vpop.permute.xlu0 %919
        %921 = vrot.lane.b32.xlu0 %v669, 12
        %v922 = vpop.permute.xlu0 %921
        %923 = vrot.lane.b32.xlu0 %v625, 12
        %v924 = vpop.permute.xlu0 %923
        %925 = vrot.lane.b32.xlu0 %v670, 12
        %v926 = vpop.permute.xlu0 %925
        %927 = vrot.lane.b32.xlu0 %v628, 12
        %v928 = vpop.permute.xlu0 %927
        %929 = vrot.lane.b32.xlu0 %v671, 12
        %v930 = vpop.permute.xlu0 %929
        %931 = vrot.lane.b32.xlu0 %v631, 12
        %v932 = vpop.permute.xlu0 %931
        %949 = vrot.lane.b32.xlu0 %v707, 16
        %v950 = vpop.permute.xlu0 %949
        %951 = vrot.lane.b32.xlu0 %v709, 16
        %v952 = vpop.permute.xlu0 %951
        %953 = vrot.lane.b32.xlu0 %v712, 16
        %v954 = vpop.permute.xlu0 %953
        %955 = vrot.lane.b32.xlu0 %v714, 16
        %v956 = vpop.permute.xlu0 %955
        %957 = vrot.lane.b32.xlu0 %v717, 16
        %v958 = vpop.permute.xlu0 %957
        %959 = vrot.lane.b32.xlu0 %v719, 16
        %v960 = vpop.permute.xlu0 %959
        %961 = vrot.lane.b32.xlu0 %v722, 16
        %v962 = vpop.permute.xlu0 %961
        %963 = vrot.lane.b32.xlu0 %v724, 16
        %v964 = vpop.permute.xlu0 %963
        %965 = vrot.lane.b32.xlu0 %v727, 16
        %v966 = vpop.permute.xlu0 %965
        %967 = vrot.lane.b32.xlu0 %v729, 16
        %v968 = vpop.permute.xlu0 %967
        %969 = vrot.lane.b32.xlu0 %v732, 16
        %v970 = vpop.permute.xlu0 %969
        %971 = vrot.lane.b32.xlu0 %v734, 16
        %v972 = vpop.permute.xlu0 %971
        %973 = vrot.lane.b32.xlu0 %v737, 16
        %v974 = vpop.permute.xlu0 %973
        %975 = vrot.lane.b32.xlu0 %v739, 16
        %v976 = vpop.permute.xlu0 %975
        %977 = vrot.lane.b32.xlu0 %v785, 16
        %v978 = vpop.permute.xlu0 %977
        %979 = vrot.lane.b32.xlu0 %v787, 16
        %v980 = vpop.permute.xlu0 %979
        %997 = vrot.lane.b32.xlu0 %v748, 20
        %v998 = vpop.permute.xlu0 %997
        %999 = vrot.lane.b32.xlu0 %v750, 20
        %v1000 = vpop.permute.xlu0 %999
        %1001 = vrot.lane.b32.xlu0 %v753, 20
        %v1002 = vpop.permute.xlu0 %1001
        %1003 = vrot.lane.b32.xlu0 %v755, 20
        %v1004 = vpop.permute.xlu0 %1003
        %1005 = vrot.lane.b32.xlu0 %v758, 20
        %v1006 = vpop.permute.xlu0 %1005
        %1007 = vrot.lane.b32.xlu0 %v760, 20
        %v1008 = vpop.permute.xlu0 %1007
        %1009 = vrot.lane.b32.xlu0 %v763, 20
        %v1010 = vpop.permute.xlu0 %1009
        %1011 = vrot.lane.b32.xlu0 %v765, 20
        %v1012 = vpop.permute.xlu0 %1011
        %1013 = vrot.lane.b32.xlu0 %v768, 20
        %v1014 = vpop.permute.xlu0 %1013
        %1015 = vrot.lane.b32.xlu0 %v770, 20
        %v1016 = vpop.permute.xlu0 %1015
        %1017 = vrot.lane.b32.xlu0 %v773, 20
        %v1018 = vpop.permute.xlu0 %1017
        %1019 = vrot.lane.b32.xlu0 %v775, 20
        %v1020 = vpop.permute.xlu0 %1019
        %1021 = vrot.lane.b32.xlu0 %v778, 20
        %v1022 = vpop.permute.xlu0 %1021
        %1023 = vrot.lane.b32.xlu0 %v780, 20
        %v1024 = vpop.permute.xlu0 %1023
        %1025 = vrot.lane.b32.xlu0 %v790, 20
        %v1026 = vpop.permute.xlu0 %1025
        %1027 = vrot.lane.b32.xlu0 %v792, 20
        %v1028 = vpop.permute.xlu0 %1027
        %1045 = vrot.lane.b32.xlu0 %v665, 24
        %v1046 = vpop.permute.xlu0 %1045
        %1047 = vrot.lane.b32.xlu0 %v613, 24
        %v1048 = vpop.permute.xlu0 %1047
        %1049 = vrot.lane.b32.xlu0 %v666, 24
        %v1050 = vpop.permute.xlu0 %1049
        %1051 = vrot.lane.b32.xlu0 %v616, 24
        %v1052 = vpop.permute.xlu0 %1051
        %1053 = vrot.lane.b32.xlu0 %v667, 24
        %v1054 = vpop.permute.xlu0 %1053
        %1055 = vrot.lane.b32.xlu0 %v619, 24
        %v1056 = vpop.permute.xlu0 %1055
        %1057 = vrot.lane.b32.xlu0 %v668, 24
        %v1058 = vpop.permute.xlu0 %1057
        %1059 = vrot.lane.b32.xlu0 %v622, 24
        %v1060 = vpop.permute.xlu0 %1059
        %1061 = vrot.lane.b32.xlu0 %v669, 24
        %v1062 = vpop.permute.xlu0 %1061
        %1063 = vrot.lane.b32.xlu0 %v625, 24
        %v1064 = vpop.permute.xlu0 %1063
        %1065 = vrot.lane.b32.xlu0 %v670, 24
        %v1066 = vpop.permute.xlu0 %1065
        %1067 = vrot.lane.b32.xlu0 %v628, 24
        %v1068 = vpop.permute.xlu0 %1067
        %1069 = vrot.lane.b32.xlu0 %v671, 24
        %v1070 = vpop.permute.xlu0 %1069
        %1071 = vrot.lane.b32.xlu0 %v631, 24
        %v1072 = vpop.permute.xlu0 %1071
        %1073 = vrot.lane.b32.xlu0 %v672, 24
        %v1074 = vpop.permute.xlu0 %1073
        %1075 = vrot.lane.b32.xlu0 %v634, 24
        %v1076 = vpop.permute.xlu0 %1075
        %1093 = vrot.lane.b32.xlu0 %v712, 28
        %v1094 = vpop.permute.xlu0 %1093
        %1095 = vrot.lane.b32.xlu0 %v714, 28
        %v1096 = vpop.permute.xlu0 %1095
        %1097 = vrot.lane.b32.xlu0 %v717, 28
        %v1098 = vpop.permute.xlu0 %1097
        %1099 = vrot.lane.b32.xlu0 %v719, 28
        %v1100 = vpop.permute.xlu0 %1099
        %1101 = vrot.lane.b32.xlu0 %v722, 28
        %v1102 = vpop.permute.xlu0 %1101
        %1103 = vrot.lane.b32.xlu0 %v724, 28
        %v1104 = vpop.permute.xlu0 %1103
        %1105 = vrot.lane.b32.xlu0 %v727, 28
        %v1106 = vpop.permute.xlu0 %1105
        %1107 = vrot.lane.b32.xlu0 %v729, 28
        %v1108 = vpop.permute.xlu0 %1107
        %1109 = vrot.lane.b32.xlu0 %v732, 28
        %v1110 = vpop.permute.xlu0 %1109
        %1111 = vrot.lane.b32.xlu0 %v734, 28
        %v1112 = vpop.permute.xlu0 %1111
        %1113 = vrot.lane.b32.xlu0 %v737, 28
        %v1114 = vpop.permute.xlu0 %1113
        %1115 = vrot.lane.b32.xlu0 %v739, 28
        %v1116 = vpop.permute.xlu0 %1115
        %1117 = vrot.lane.b32.xlu0 %v785, 28
        %v1118 = vpop.permute.xlu0 %1117
        %1119 = vrot.lane.b32.xlu0 %v787, 28
        %v1120 = vpop.permute.xlu0 %1119
        %1121 = vrot.lane.b32.xlu0 %v797, 28
        %v1122 = vpop.permute.xlu0 %1121
        %1123 = vrot.lane.b32.xlu0 %v799, 28
        %v1124 = vpop.permute.xlu0 %1123
        %1141 = vrot.lane.b32.xlu0 %v753, 32
        %v1142 = vpop.permute.xlu0 %1141
        %1143 = vrot.lane.b32.xlu0 %v755, 32
        %v1144 = vpop.permute.xlu0 %1143
        %1145 = vrot.lane.b32.xlu0 %v758, 32
        %v1146 = vpop.permute.xlu0 %1145
        %1147 = vrot.lane.b32.xlu0 %v760, 32
        %v1148 = vpop.permute.xlu0 %1147
        %1149 = vrot.lane.b32.xlu0 %v763, 32
        %v1150 = vpop.permute.xlu0 %1149
        %1151 = vrot.lane.b32.xlu0 %v765, 32
        %v1152 = vpop.permute.xlu0 %1151
        %1153 = vrot.lane.b32.xlu0 %v768, 32
        %v1154 = vpop.permute.xlu0 %1153
        %1155 = vrot.lane.b32.xlu0 %v770, 32
        %v1156 = vpop.permute.xlu0 %1155
        %1157 = vrot.lane.b32.xlu0 %v773, 32
        %v1158 = vpop.permute.xlu0 %1157
        %1159 = vrot.lane.b32.xlu0 %v775, 32
        %v1160 = vpop.permute.xlu0 %1159
        %1161 = vrot.lane.b32.xlu0 %v778, 32
        %v1162 = vpop.permute.xlu0 %1161
        %1163 = vrot.lane.b32.xlu0 %v780, 32
        %v1164 = vpop.permute.xlu0 %1163
        %1165 = vrot.lane.b32.xlu0 %v790, 32
        %v1166 = vpop.permute.xlu0 %1165
        %1167 = vrot.lane.b32.xlu0 %v792, 32
        %v1168 = vpop.permute.xlu0 %1167
        %1169 = vrot.lane.b32.xlu0 %v802, 32
        %v1170 = vpop.permute.xlu0 %1169
        %1171 = vrot.lane.b32.xlu0 %v804, 32
        %v1172 = vpop.permute.xlu0 %1171
        %vm1189 = vcmask 31744
        %v1190 = vsel %vm1189, %v663, %v806
        %v1191 = vsel %vm1189, %v607, %v808
        %v1192 = vsel %vm1189, %v664, %v810
        %v1193 = vsel %vm1189, %v610, %v812
        %v1194 = vsel %vm1189, %v665, %v814
        %v1195 = vsel %vm1189, %v613, %v816
        %v1196 = vsel %vm1189, %v666, %v818
        %v1197 = vsel %vm1189, %v616, %v820
        %v1198 = vsel %vm1189, %v667, %v822
        %v1199 = vsel %vm1189, %v619, %v824
        %v1200 = vsel %vm1189, %v668, %v826
        %v1201 = vsel %vm1189, %v622, %v828
        %v1202 = vsel %vm1189, %v669, %v830
        %v1203 = vsel %vm1189, %v625, %v832
        %v1204 = vsel %vm1189, %v670, %v834
        %v1205 = vsel %vm1189, %v628, %v836
        %vm1206 = vcmask 64512
        %v1207 = vsel %vm1206, %v1190, %v854
        %v1208 = vsel %vm1206, %v1191, %v856
        %v1209 = vsel %vm1206, %v1192, %v858
        %v1210 = vsel %vm1206, %v1193, %v860
        %v1211 = vsel %vm1206, %v1194, %v862
        %v1212 = vsel %vm1206, %v1195, %v864
        %v1213 = vsel %vm1206, %v1196, %v866
        %v1214 = vsel %vm1206, %v1197, %v868
        %v1215 = vsel %vm1206, %v1198, %v870
        %v1216 = vsel %vm1206, %v1199, %v872
        %v1217 = vsel %vm1206, %v1200, %v874
        %v1218 = vsel %vm1206, %v1201, %v876
        %v1219 = vsel %vm1206, %v1202, %v878
        %v1220 = vsel %vm1206, %v1203, %v880
        %v1221 = vsel %vm1206, %v1204, %v882
        %v1222 = vsel %vm1206, %v1205, %v884
        %vm1223 = vcmask 97280
        %v1224 = vsel %vm1223, %v1207, %v902
        %v1225 = vsel %vm1223, %v1208, %v904
        %v1226 = vsel %vm1223, %v1209, %v906
        %v1227 = vsel %vm1223, %v1210, %v908
        %v1228 = vsel %vm1223, %v1211, %v910
        %v1229 = vsel %vm1223, %v1212, %v912
        %v1230 = vsel %vm1223, %v1213, %v914
        %v1231 = vsel %vm1223, %v1214, %v916
        %v1232 = vsel %vm1223, %v1215, %v918
        %v1233 = vsel %vm1223, %v1216, %v920
        %v1234 = vsel %vm1223, %v1217, %v922
        %v1235 = vsel %vm1223, %v1218, %v924
        %v1236 = vsel %vm1223, %v1219, %v926
        %v1237 = vsel %vm1223, %v1220, %v928
        %v1238 = vsel %vm1223, %v1221, %v930
        %v1239 = vsel %vm1223, %v1222, %v932
        %v1240 = vsel %vm398, %v1224, %v950
        %v1241 = vsel %vm398, %v1225, %v952
        %v1242 = vsel %vm398, %v1226, %v954
        %v1243 = vsel %vm398, %v1227, %v956
        %v1244 = vsel %vm398, %v1228, %v958
        %v1245 = vsel %vm398, %v1229, %v960
        %v1246 = vsel %vm398, %v1230, %v962
        %v1247 = vsel %vm398, %v1231, %v964
        %v1248 = vsel %vm398, %v1232, %v966
        %v1249 = vsel %vm398, %v1233, %v968
        %v1250 = vsel %vm398, %v1234, %v970
        %v1251 = vsel %vm398, %v1235, %v972
        %v1252 = vsel %vm398, %v1236, %v974
        %v1253 = vsel %vm398, %v1237, %v976
        %v1254 = vsel %vm398, %v1238, %v978
        %v1255 = vsel %vm398, %v1239, %v980
        %vm1256 = vcmask 162816
        %v1257 = vsel %vm1256, %v1240, %v998
        %v1258 = vsel %vm1256, %v1241, %v1000
        %v1259 = vsel %vm1256, %v1242, %v1002
        %v1260 = vsel %vm1256, %v1243, %v1004
        %v1261 = vsel %vm1256, %v1244, %v1006
        %v1262 = vsel %vm1256, %v1245, %v1008
        %v1263 = vsel %vm1256, %v1246, %v1010
        %v1264 = vsel %vm1256, %v1247, %v1012
        %v1265 = vsel %vm1256, %v1248, %v1014
        %v1266 = vsel %vm1256, %v1249, %v1016
        %v1267 = vsel %vm1256, %v1250, %v1018
        %v1268 = vsel %vm1256, %v1251, %v1020
        %v1269 = vsel %vm1256, %v1252, %v1022
        %v1270 = vsel %vm1256, %v1253, %v1024
        %v1271 = vsel %vm1256, %v1254, %v1026
        %v1272 = vsel %vm1256, %v1255, %v1028
        %vm1273 = vcmask 195584
        %v1274 = vsel %vm1273, %v1257, %v1046
        %v1275 = vsel %vm1273, %v1258, %v1048
        %v1276 = vsel %vm1273, %v1259, %v1050
        %v1277 = vsel %vm1273, %v1260, %v1052
        %v1278 = vsel %vm1273, %v1261, %v1054
        %v1279 = vsel %vm1273, %v1262, %v1056
        %v1280 = vsel %vm1273, %v1263, %v1058
        %v1281 = vsel %vm1273, %v1264, %v1060
        %v1282 = vsel %vm1273, %v1265, %v1062
        %v1283 = vsel %vm1273, %v1266, %v1064
        %v1284 = vsel %vm1273, %v1267, %v1066
        %v1285 = vsel %vm1273, %v1268, %v1068
        %v1286 = vsel %vm1273, %v1269, %v1070
        %v1287 = vsel %vm1273, %v1270, %v1072
        %v1288 = vsel %vm1273, %v1271, %v1074
        %v1289 = vsel %vm1273, %v1272, %v1076
        %vm1290 = vcmask 228352
        %v1291 = vsel %vm1290, %v1274, %v1094
        %v1292 = vsel %vm1290, %v1275, %v1096
        %v1293 = vsel %vm1290, %v1276, %v1098
        %v1294 = vsel %vm1290, %v1277, %v1100
        %v1295 = vsel %vm1290, %v1278, %v1102
        %v1296 = vsel %vm1290, %v1279, %v1104
        %v1297 = vsel %vm1290, %v1280, %v1106
        %v1298 = vsel %vm1290, %v1281, %v1108
        %v1299 = vsel %vm1290, %v1282, %v1110
        %v1300 = vsel %vm1290, %v1283, %v1112
        %v1301 = vsel %vm1290, %v1284, %v1114
        %v1302 = vsel %vm1290, %v1285, %v1116
        %v1303 = vsel %vm1290, %v1286, %v1118
        %v1304 = vsel %vm1290, %v1287, %v1120
        %v1305 = vsel %vm1290, %v1288, %v1122
        %v1306 = vsel %vm1290, %v1289, %v1124
        %vm1307 = vcmask 261120
        %v1308 = vsel %vm1307, %v1291, %v1142
        %v1309 = vsel %vm1307, %v1292, %v1144
        %v1310 = vsel %vm1307, %v1293, %v1146
        %v1311 = vsel %vm1307, %v1294, %v1148
        %v1312 = vsel %vm1307, %v1295, %v1150
        %v1313 = vsel %vm1307, %v1296, %v1152
        %v1314 = vsel %vm1307, %v1297, %v1154
        %v1315 = vsel %vm1307, %v1298, %v1156
        %v1316 = vsel %vm1307, %v1299, %v1158
        %v1317 = vsel %vm1307, %v1300, %v1160
        %v1318 = vsel %vm1307, %v1301, %v1162
        %v1319 = vsel %vm1307, %v1302, %v1164
        %v1320 = vsel %vm1307, %v1303, %v1166
        %v1321 = vsel %vm1307, %v1304, %v1168
        %v1322 = vsel %vm1307, %v1305, %v1170
        %v1323 = vsel %vm1307, %v1306, %v1172
        %v1324 = vld [vmem:[%s4] sm:$0xff]
        %v1325 = vld [vmem:[%s4 + $0x8] sm:$0xff]
        %v1326 = vld [vmem:[%s4 + $0x10] sm:$0xff]
        %v1327 = vld [vmem:[%s4 + $0x18] sm:$0xff]
        %v1328 = vld [vmem:[%s4 + $0x20] sm:$0xf]
        %v1329 = vld [vmem:[%s5] sm:$0x1]
        %v1331 = vperm.slane %v1329, 0
        %vm1333 = vcmask 293888
        %v1335 = vsel %vm1333, %v1308, 0
        %v1338 = vsel %vm1333, %v1309, 0
        %v1341 = vsel %vm1333, %v1310, 0
        %v1344 = vsel %vm1333, %v1311, 0
        %v1347 = vsel %vm1333, %v1312, 0
        %v1350 = vsel %vm1333, %v1313, 0
        %v1353 = vsel %vm1333, %v1314, 0
        %v1356 = vsel %vm1333, %v1315, 0
        %v1359 = vsel %vm1333, %v1316, 0
        %v1362 = vsel %vm1333, %v1317, 0
        %v1365 = vsel %vm1333, %v1318, 0
        %v1368 = vsel %vm1333, %v1319, 0
        %v1371 = vsel %vm1333, %v1320, 0
        %v1374 = vsel %vm1333, %v1321, 0
        %v1377 = vsel %vm1333, %v1322, 0
        %v1380 = vsel %vm1333, %v1323, 0
        %vm1382 = vcmask 1043456
        %v1384 = vsel %vm1382, %v1328, 0
        %1386 = vmatpush.msra.mxu0 0.0
        %1387 = vmatpush.msra.mxu0 0.0
        %1388 = vmatpush.msra.mxu0 0.0
        %1389 = vmatpush.msra.mxu0 0.0
        %1390 = vmatpush.msra.mxu0 0.0
        %1391 = vmatpush.msra.mxu0 0.0
        %1392 = vmatpush.msra.mxu0 0.0
        %1393 = vmatpush.msra.mxu0 0.0
        %1394 = vmatpush.msra.mxu0 0.0
        %1395 = vmatpush.msra.mxu0 0.0
        %1396 = vmatpush.msra.mxu0 0.0
        %1397 = vmatpush.msra.mxu0 %v1384
        %1398 = vmatpush.msra.mxu0 %v1327
        %1399 = vmatpush.msra.mxu0 %v1326
        %1400 = vmatpush.msra.mxu0 %v1325
        %1401 = vmatpush.msra.mxu0 %v1324
        %1402 = vmatmul.f32.gmra.mxu0 %v1335
        %v1403 = vpop.f32.mrf.mxu0
        %v1404 = vadd.f32 %v1331, %v1403
        %1405 = vmatmul.f32.gmra.mxu0 %v1338
        %v1406 = vpop.f32.mrf.mxu0
        %v1407 = vadd.f32 %v1331, %v1406
        %1408 = vmatmul.f32.gmra.mxu0 %v1341
        %v1409 = vpop.f32.mrf.mxu0
        %v1410 = vadd.f32 %v1331, %v1409
        %1411 = vmatmul.f32.gmra.mxu0 %v1344
        %v1412 = vpop.f32.mrf.mxu0
        %v1413 = vadd.f32 %v1331, %v1412
        %1414 = vmatmul.f32.gmra.mxu0 %v1347
        %v1415 = vpop.f32.mrf.mxu0
        %v1416 = vadd.f32 %v1331, %v1415
        %1417 = vmatmul.f32.gmra.mxu0 %v1350
        %v1418 = vpop.f32.mrf.mxu0
        %v1419 = vadd.f32 %v1331, %v1418
        %1420 = vmatmul.f32.gmra.mxu0 %v1353
        %v1421 = vpop.f32.mrf.mxu0
        %v1422 = vadd.f32 %v1331, %v1421
        %1423 = vmatmul.f32.gmra.mxu0 %v1356
        %v1424 = vpop.f32.mrf.mxu0
        %v1425 = vadd.f32 %v1331, %v1424
        %1426 = vmatmul.f32.gmra.mxu0 %v1359
        %v1427 = vpop.f32.mrf.mxu0
        %v1428 = vadd.f32 %v1331, %v1427
        %1429 = vmatmul.f32.gmra.mxu0 %v1362
        %v1430 = vpop.f32.mrf.mxu0
        %v1431 = vadd.f32 %v1331, %v1430
        %1432 = vmatmul.f32.gmra.mxu0 %v1365
        %v1433 = vpop.f32.mrf.mxu0
        %v1434 = vadd.f32 %v1331, %v1433
        %1435 = vmatmul.f32.gmra.mxu0 %v1368
        %v1436 = vpop.f32.mrf.mxu0
        %v1437 = vadd.f32 %v1331, %v1436
        %1438 = vmatmul.f32.gmra.mxu0 %v1371
        %v1439 = vpop.f32.mrf.mxu0
        %v1440 = vadd.f32 %v1331, %v1439
        %1441 = vmatmul.f32.gmra.mxu0 %v1374
        %v1442 = vpop.f32.mrf.mxu0
        %v1443 = vadd.f32 %v1331, %v1442
        %1444 = vmatmul.f32.gmra.mxu0 %v1377
        %v1445 = vpop.f32.mrf.mxu0
        %v1446 = vadd.f32 %v1331, %v1445
        %1447 = vmatmul.f32.gmra.mxu0 %v1380
        %v1448 = vpop.f32.mrf.mxu0
        %v1449 = vadd.f32 %v1331, %v1448
        %1450 = vdwg.mxu0
        %v1451 = vmax.f32 %v1404, 0.0
        %v1452 = vmax.f32 %v1407, 0.0
        %v1453 = vmax.f32 %v1410, 0.0
        %v1454 = vmax.f32 %v1413, 0.0
        %v1455 = vmax.f32 %v1416, 0.0
        %v1456 = vmax.f32 %v1419, 0.0
        %v1457 = vmax.f32 %v1422, 0.0
        %v1458 = vmax.f32 %v1425, 0.0
        %v1459 = vmax.f32 %v1428, 0.0
        %v1460 = vmax.f32 %v1431, 0.0
        %v1461 = vmax.f32 %v1434, 0.0
        %v1462 = vmax.f32 %v1437, 0.0
        %v1463 = vmax.f32 %v1440, 0.0
        %v1464 = vmax.f32 %v1443, 0.0
        %v1465 = vmax.f32 %v1446, 0.0
        %v1466 = vmax.f32 %v1449, 0.0
        %v1467 = vld [vmem:[%s6] sm:$0xf]
        %v1468 = vld [vmem:[%s7] sm:$0x1]
        %v1470 = vperm.slane %v1468, 0
        %v1473 = vsel %vm1189, %v1451, 0
        %v1476 = vsel %vm1189, %v1452, 0
        %v1479 = vsel %vm1189, %v1453, 0
        %v1482 = vsel %vm1189, %v1454, 0
        %v1485 = vsel %vm1189, %v1455, 0
        %v1488 = vsel %vm1189, %v1456, 0
        %v1491 = vsel %vm1189, %v1457, 0
        %v1494 = vsel %vm1189, %v1458, 0
        %v1497 = vsel %vm1189, %v1459, 0
        %v1500 = vsel %vm1189, %v1460, 0
        %v1503 = vsel %vm1189, %v1461, 0
        %v1506 = vsel %vm1189, %v1462, 0
        %v1509 = vsel %vm1189, %v1463, 0
        %v1512 = vsel %vm1189, %v1464, 0
        %v1515 = vsel %vm1189, %v1465, 0
        %v1518 = vsel %vm1189, %v1466, 0
        %v1521 = vsel %vm1382, %v1467, 0
        %1523 = vmatpush.msra.mxu0 0.0
        %1524 = vmatpush.msra.mxu0 0.0
        %1525 = vmatpush.msra.mxu0 0.0
        %1526 = vmatpush.msra.mxu0 0.0
        %1527 = vmatpush.msra.mxu0 0.0
        %1528 = vmatpush.msra.mxu0 0.0
        %1529 = vmatpush.msra.mxu0 0.0
        %1530 = vmatpush.msra.mxu0 0.0
        %1531 = vmatpush.msra.mxu0 0.0
        %1532 = vmatpush.msra.mxu0 0.0
        %1533 = vmatpush.msra.mxu0 0.0
        %1534 = vmatpush.msra.mxu0 0.0
        %1535 = vmatpush.msra.mxu0 0.0
        %1536 = vmatpush.msra.mxu0 0.0
        %1537 = vmatpush.msra.mxu0 0.0
        %1538 = vmatpush.msra.mxu0 %v1521
        %1539 = vmatmul.f32.gmra.mxu0 %v1473
        %v1540 = vpop.f32.mrf.mxu0
        %v1541 = vadd.f32 %v1470, %v1540
        %1542 = vmatmul.f32.gmra.mxu0 %v1476
        %v1543 = vpop.f32.mrf.mxu0
        %v1544 = vadd.f32 %v1470, %v1543
        %1545 = vmatmul.f32.gmra.mxu0 %v1479
        %v1546 = vpop.f32.mrf.mxu0
        %v1547 = vadd.f32 %v1470, %v1546
        %1548 = vmatmul.f32.gmra.mxu0 %v1482
        %v1549 = vpop.f32.mrf.mxu0
        %v1550 = vadd.f32 %v1470, %v1549
        %1551 = vmatmul.f32.gmra.mxu0 %v1485
        %v1552 = vpop.f32.mrf.mxu0
        %v1553 = vadd.f32 %v1470, %v1552
        %1554 = vmatmul.f32.gmra.mxu0 %v1488
        %v1555 = vpop.f32.mrf.mxu0
        %v1556 = vadd.f32 %v1470, %v1555
        %1557 = vmatmul.f32.gmra.mxu0 %v1491
        %v1558 = vpop.f32.mrf.mxu0
        %v1559 = vadd.f32 %v1470, %v1558
        %1560 = vmatmul.f32.gmra.mxu0 %v1494
        %v1561 = vpop.f32.mrf.mxu0
        %v1562 = vadd.f32 %v1470, %v1561
        %1563 = vmatmul.f32.gmra.mxu0 %v1497
        %v1564 = vpop.f32.mrf.mxu0
        %v1565 = vadd.f32 %v1470, %v1564
        %1566 = vmatmul.f32.gmra.mxu0 %v1500
        %v1567 = vpop.f32.mrf.mxu0
        %v1568 = vadd.f32 %v1470, %v1567
        %1569 = vmatmul.f32.gmra.mxu0 %v1503
        %v1570 = vpop.f32.mrf.mxu0
        %v1571 = vadd.f32 %v1470, %v1570
        %1572 = vmatmul.f32.gmra.mxu0 %v1506
        %v1573 = vpop.f32.mrf.mxu0
        %v1574 = vadd.f32 %v1470, %v1573
        %1575 = vmatmul.f32.gmra.mxu0 %v1509
        %v1576 = vpop.f32.mrf.mxu0
        %v1577 = vadd.f32 %v1470, %v1576
        %1578 = vmatmul.f32.gmra.mxu0 %v1512
        %v1579 = vpop.f32.mrf.mxu0
        %v1580 = vadd.f32 %v1470, %v1579
        %1581 = vmatmul.f32.gmra.mxu0 %v1515
        %v1582 = vpop.f32.mrf.mxu0
        %v1583 = vadd.f32 %v1470, %v1582
        %1584 = vmatmul.f32.gmra.mxu0 %v1518
        %v1585 = vpop.f32.mrf.mxu0
        %v1586 = vadd.f32 %v1470, %v1585
        %1587 = vdwg.mxu0
        %v1588 = vadd.f32 %v1541, %v372
        %v1589 = vadd.f32 %v1544, %v373
        %v1590 = vadd.f32 %v1547, %v374
        %v1591 = vadd.f32 %v1550, %v375
        %v1592 = vadd.f32 %v1553, %v376
        %v1593 = vadd.f32 %v1556, %v377
        %v1594 = vadd.f32 %v1559, %v378
        %v1595 = vadd.f32 %v1562, %v379
        %v1596 = vadd.f32 %v1565, %v380
        %v1597 = vadd.f32 %v1568, %v381
        %v1598 = vadd.f32 %v1571, %v382
        %v1599 = vadd.f32 %v1574, %v383
        %v1600 = vadd.f32 %v1577, %v384
        %v1601 = vadd.f32 %v1580, %v385
        %v1602 = vadd.f32 %v1583, %v386
        %v1603 = vadd.f32 %v1586, %v387
        %v1604 = vmax.f32 %v1588, 0.0
        %v1605 = vmax.f32 %v1589, 0.0
        %v1606 = vmax.f32 %v1590, 0.0
        %v1607 = vmax.f32 %v1591, 0.0
        %v1608 = vmax.f32 %v1592, 0.0
        %v1609 = vmax.f32 %v1593, 0.0
        %v1610 = vmax.f32 %v1594, 0.0
        %v1611 = vmax.f32 %v1595, 0.0
        %v1612 = vmax.f32 %v1596, 0.0
        %v1613 = vmax.f32 %v1597, 0.0
        %v1614 = vmax.f32 %v1598, 0.0
        %v1615 = vmax.f32 %v1599, 0.0
        %v1616 = vmax.f32 %v1600, 0.0
        %v1617 = vmax.f32 %v1601, 0.0
        %v1618 = vmax.f32 %v1602, 0.0
        %v1619 = vmax.f32 %v1603, 0.0
        %1620 = vst.msk [vmem:[%s350] sm:$0xff] %vm398, %v1604
        %1621 = vst.msk [vmem:[%s350 + $0x8] sm:$0xff] %vm398, %v1605
        %1622 = vst.msk [vmem:[%s350 + $0x10] sm:$0xff] %vm398, %v1606
        %1623 = vst.msk [vmem:[%s350 + $0x18] sm:$0xff] %vm398, %v1607
        %1624 = vst.msk [vmem:[%s350 + $0x20] sm:$0xff] %vm398, %v1608
        %1625 = vst.msk [vmem:[%s350 + $0x28] sm:$0xff] %vm398, %v1609
        %1626 = vst.msk [vmem:[%s350 + $0x30] sm:$0xff] %vm398, %v1610
        %1627 = vst.msk [vmem:[%s350 + $0x38] sm:$0xff] %vm398, %v1611
        %1628 = vst.msk [vmem:[%s350 + $0x40] sm:$0xff] %vm398, %v1612
        %1629 = vst.msk [vmem:[%s350 + $0x48] sm:$0xff] %vm398, %v1613
        %1630 = vst.msk [vmem:[%s350 + $0x50] sm:$0xff] %vm398, %v1614
        %1631 = vst.msk [vmem:[%s350 + $0x58] sm:$0xff] %vm398, %v1615
        %1632 = vst.msk [vmem:[%s350 + $0x60] sm:$0xff] %vm398, %v1616
        %1633 = vst.msk [vmem:[%s350 + $0x68] sm:$0xff] %vm398, %v1617
        %1634 = vst.msk [vmem:[%s350 + $0x70] sm:$0xff] %vm398, %v1618
        %1635 = vst.msk [vmem:[%s350 + $0x78] sm:$0xff] %vm398, %v1619
        %s1636 = sand.u32 %s226, 1
        %s1637 = scalar_lea.sflag [#allocation3], %s1636
        %s1638 = sand.u32 %s226, 1
        %s1639 = smul.addr %s1638, 128
        %s1640 = scalar_lea.vmem [#allocation2], %s1639
        // Predicated region
        $region53: #{bottleneck_forward_nhwc.1} parent=51 // pred_check
          %p1641 = pneg %p236
        $region54: #{bottleneck_forward_nhwc.1} parent=51 // pred_check_branch
          %1643 = sbr.rel (%p1641) target = $region56
        $region55: #{bottleneck_forward_nhwc.1} parent=51 // pred_region
          %s1644 = smul.u32 16, %s27
          %1646 = vsyncadd %s1637, 0
          %s1647 = smul.addr %s26, 32
          %s1648 = sadd.s32 %s1644, %s1647
          %s1649 = smul.addr %s1648, 8
          %s1650 = scalar_lea.hbm %s8, %s1649
          %s1651 = sshll.u32 %s1640, 4
          %s1652 = int_to_ptr.vmem [resolvable:$true] %s1651
          %s1653 = sshll.u32 %s1650, 4
          %s1654 = int_to_ptr.hbm [resolvable:$true] %s1653
          %1659 = dma.vmem_to_hbm [thread:$0]  %s1652, 2048, %s1654, %s1637, 128, 128, 8
        $region56: #{bottleneck_forward_nhwc.1} parent=51 // pred_fallthru
          _
      $region52: #{bottleneck_forward_nhwc.1} parent=5 // pred_fallthru
        _
      %p1660 = scmp.le.s32.totalorder 2, %s17
      // Predicated region
      $region57: #{bottleneck_forward_nhwc.1} parent=5 // pred_check
        %p1661 = pneg %p1660
      $region58: #{bottleneck_forward_nhwc.1} parent=5 // pred_check_branch
        %1663 = sbr.rel (%p1661) target = $region60
      $region59: #{bottleneck_forward_nhwc.1} parent=5 // pred_region
        %s1664 = ssub.s32 %s17, 2
        // Predicated region
        $region61: #{bottleneck_forward_nhwc.1} parent=59 // pred_check
          %p1665 = pneg %p242
        $region62: #{bottleneck_forward_nhwc.1} parent=59 // pred_check_branch
          %1667 = sbr.rel (%p1665) target = $region64
        $region63: #{bottleneck_forward_nhwc.1} parent=59 // pred_region
          %s1668 = sand.u32 %s227, 1
          %s1669 = scalar_lea.sflag [#allocation3], %s1668
          %s1670 = sand.u32 %s227, 1
          %s1671 = smul.addr %s1670, 128
          %s1672 = scalar_lea.vmem [#allocation2], %s1671
          %1674 = dma.done %s1669, 2048
        $region64: #{bottleneck_forward_nhwc.1} parent=59 // pred_fallthru
          _
      $region60: #{bottleneck_forward_nhwc.1} parent=5 // pred_fallthru
        _
    $region6: #{bottleneck_forward_nhwc.1} parent=1 // loop_footer
      %s21 = sadd.s32 1, %s17
    $region7: #{bottleneck_forward_nhwc.1} parent=1 // loop_footer_branch
      %16 = sbr.rel target = $region3
    $region8: #{bottleneck_forward_nhwc.1} parent=1 // loop_exit
      _
    %1675 = vsyncpa [#allocation3], 1
    %s1676 = scalar_lea.sflag [#allocation3], 1
    %1677 = vsyncpa %s1676, 1

</llo_original>
